<compile_context>
chip_gen: v6e
topology: v6e:2x2x1
jax: 0.10.0
libtpu: 0.0.40
codegen_flags: <defaults>
</compile_context>

<pallas_src>
from functools import partial

import jax
import jax.numpy as jnp
import numpy as np
from jax.experimental import pallas as pl
from jax.experimental.pallas import tpu as pltpu


def _round_up(x, m):
    return ((x + m - 1) // m) * m


def _vmem_capacity_bytes():
    """Physical per-core VMEM; conservative 64 MiB (v7x) fallback."""
    try:
        info = pltpu.get_tpu_info()
        cap = getattr(info, "vmem_capacity_bytes", None)
        if cap:
            return int(cap)
    except Exception:
        pass
    return 64 << 20


def _vmem_usage_bytes(tm, Np, Fp, Hp, a_resident):
    a_bytes = 2 * Np * Np * 2 if a_resident else 2 * tm * Np * 2
    return (a_bytes
            + 2 * tm * Fp * 2      # h row panels (bf16, double-buffered)
            + 2 * Fp * Hp * 2      # W_k (bf16, double-buffered)
            + 2 * 8 * Hp * 4       # b_k (f32, double-buffered, sublane-padded)
            + 2 * tm * Hp * 4      # output panels (f32, double-buffered)
            + 2 * Np * Fp * 2)     # ping-pong x carry scratch (bf16)


def _select_tiling(N, F, H, vmem_cap):
    """Pick (tm, Np, Fp, Hp, a_resident, usage) to fit ~3/4 of VMEM."""
    Fp = _round_up(F, 128)
    Hp = _round_up(H, 128)
    Np = _round_up(N, 128)            # lane-dense A panels even for small N
    budget = (vmem_cap * 3) // 4      # headroom for compiler scratch

    cands = [t for t in range(min(Np, 1024), 127, -128) if Np % t == 0]
    if not cands:
        cands = [128]
    # Prefer a VMEM-resident A (largest HBM-traffic win), then the biggest
    # row panel that still fits.
    for a_resident in (True, False):
        for tm in cands:
            u = _vmem_usage_bytes(tm, Np, Fp, Hp, a_resident)
            if u <= budget:
                return tm, Np, Fp, Hp, a_resident, u
    tm = cands[-1]
    return tm, Np, Fp, Hp, False, _vmem_usage_bytes(tm, Np, Fp, Hp, False)


def lsgcl_kernel(norm_flag, a_resident, a_ref, h_ref, w_ref, b_ref,
                 out_ref, x_scr):
    """Grid = (K+1 hops, row panels).

    x_scr is a (2, Np, Fp) bf16 ping-pong carry of A_hat^k @ h; slot (k % 2)
    is written panel-by-panel during hop k while slot (1 - k % 2) holds the
    complete previous hop.  The lin1 matmul + bias + L2-normalize epilogue is
    fused into each hop branch so the fresh hop never round-trips VMEM before
    feeding the W matmul.
    """
    k = pl.program_id(0)              # hop index 0..K
    r = pl.program_id(1)              # row-panel index
    tm = out_ref.shape[0]             # panel rows (static)
    row0 = pl.multiple_of(r * tm, tm)
    p = k % 2                         # ping-pong slot for the current hop

    def a_panel():
        if a_resident:
            # Full A lives in VMEM; slice this grid step's row panel.
            return a_ref[pl.ds(row0, tm), :]
        return a_ref[...]

    def lin_out(xb):
        # y = lin1[k](x_k[panel]) : bf16 MXU matmul, f32 accumulate, f32 bias.
        y = jnp.dot(xb, w_ref[0], preferred_element_type=jnp.float32) + b_ref[0]
        if norm_flag == 1:
            # F.normalize(y, p=2, dim=1) == y / max(||y||, 1e-12), EUP rsqrt.
            ss = jnp.sum(y * y, axis=1, keepdims=True)
            y = y * jax.lax.rsqrt(jnp.maximum(ss, 1e-24))
        out_ref[...] = y.astype(out_ref.dtype)

    @pl.when(k == 0)
    def _():
        # x_0 = h (already bf16, lane-padded)
        xb = h_ref[...]
        x_scr[0, pl.ds(row0, tm), :] = xb
        lin_out(xb)

    @pl.when(jnp.logical_and(k > 0, p == 0))
    def _():
        # x_k[panel] = A_hat[panel, :] @ x_{k-1}  (bf16 MXU, f32 accumulate)
        xf = jnp.dot(a_panel(), x_scr[1], preferred_element_type=jnp.float32)
        xb = xf.astype(jnp.bfloat16)
        x_scr[0, pl.ds(row0, tm), :] = xb      # carry for the next hop
        lin_out(xb)

    @pl.when(jnp.logical_and(k > 0, p == 1))
    def _():
        xf = jnp.dot(a_panel(), x_scr[0], preferred_element_type=jnp.float32)
        xb = xf.astype(jnp.bfloat16)
        x_scr[1, pl.ds(row0, tm), :] = xb
        lin_out(xb)


def prepare_lsgcl(h, a_hat, weights, biases):
    """One-time padding / bf16 casting of the operands (A is static across
    forward passes, so hoist this out of the per-call path)."""
    N, F = h.shape
    Kp1, Fw, H = weights.shape
    assert Fw == F and a_hat.shape == (N, N) and biases.shape == (Kp1, H)

    cap = _vmem_capacity_bytes()
    tm, Np, Fp, Hp, a_resident, usage = _select_tiling(N, F, H, cap)

    h_p = jnp.zeros((Np, Fp), jnp.bfloat16).at[:N, :F].set(
        h.astype(jnp.bfloat16))
    a_p = jnp.zeros((Np, Np), jnp.bfloat16).at[:N, :N].set(
        a_hat.astype(jnp.bfloat16))
    w_p = jnp.zeros((Kp1, Fp, Hp), jnp.bfloat16).at[:, :F, :H].set(
        weights.astype(jnp.bfloat16))
    b_p = jnp.zeros((Kp1, 1, Hp), jnp.float32).at[:, 0, :H].set(
        biases.astype(jnp.float32))

    return dict(a_p=a_p, h_p=h_p, w_p=w_p, b_p=b_p,
                N=N, H=H, Kp1=Kp1, tm=tm, Np=Np, Fp=Fp, Hp=Hp,
                a_resident=a_resident, vmem_usage=usage, vmem_cap=cap)


def lsgcl_forward_prepared(prep, norm: int = 1):
    a_p, h_p, w_p, b_p = prep["a_p"], prep["h_p"], prep["w_p"], prep["b_p"]
    N, H, Kp1 = prep["N"], prep["H"], prep["Kp1"]
    tm, Np, Fp, Hp = prep["tm"], prep["Np"], prep["Fp"], prep["Hp"]
    a_resident = prep["a_resident"]
    R = Np // tm

    if a_resident:
        # Constant block index -> A is DMA'd once and stays VMEM-resident.
        a_spec = pl.BlockSpec((Np, Np), lambda k, r: (0, 0))
    else:
        # Stream (tm, Np) row panels; pin the index at hop 0 (A unused there)
        # so the pipeline skips redundant DMAs.
        a_spec = pl.BlockSpec((tm, Np), lambda k, r: (jnp.where(k == 0, 0, r), 0))
    # h is only needed at hop 0; pin it afterwards.
    h_spec = pl.BlockSpec((tm, Fp), lambda k, r: (jnp.where(k == 0, r, 0), 0))

    vmem_limit = int(min(max(prep["vmem_usage"] + (8 << 20), 32 << 20),
                         prep["vmem_cap"]))

    a_bytes = Np * Np * 2 * (1 if a_resident else max(Kp1 - 1, 1))
    cost = pl.CostEstimate(
        flops=int(2 * (Kp1 - 1) * Np * Np * Fp + 2 * Kp1 * Np * Fp * Hp),
        transcendentals=int(Kp1 * Np if norm == 1 else 0),
        bytes_accessed=int(a_bytes + Np * Fp * 2 + Kp1 * Fp * Hp * 2
                           + Kp1 * Hp * 4 + Np * Kp1 * Hp * 4),
    )

    out_p = pl.pallas_call(
        partial(lsgcl_kernel, int(norm), bool(a_resident)),
        out_shape=jax.ShapeDtypeStruct((Np, Kp1 * Hp), jnp.float32),
        grid_spec=pltpu.PrefetchScalarGridSpec(
            num_scalar_prefetch=0,
            grid=(Kp1, R),
            in_specs=[
                a_spec,                                             # A_hat
                h_spec,                                             # h panel
                pl.BlockSpec((1, Fp, Hp), lambda k, r: (k, 0, 0)),  # W_k
                pl.BlockSpec((1, 1, Hp), lambda k, r: (k, 0, 0)),   # b_k
            ],
            out_specs=pl.BlockSpec((tm, Hp), lambda k, r: (r, k)),
            scratch_shapes=[pltpu.VMEM((2, Np, Fp), jnp.bfloat16)],
        ),
        compiler_params=pltpu.CompilerParams(
            # Both axes sequential: the hop axis carries x_scr and every row
            # panel of hop k-1 must land before hop k reads the other slot.
            dimension_semantics=("arbitrary", "arbitrary"),
            vmem_limit_bytes=vmem_limit),
        cost_estimate=cost,
    )(a_p, h_p, w_p, b_p)

    if Hp != H:
        out_p = out_p.reshape(Np, Kp1, Hp)[:, :, :H].reshape(Np, Kp1 * H)
    return out_p[:N]


def lsgcl_forward(h, a_hat, weights, biases, norm: int = 1):
    """h: [N, nfeat] f32, a_hat: [N, N] f32,
    weights: [K+1, nfeat, H] f32 (already transposed: y = x @ W + b),
    biases: [K+1, H] f32.  Returns [N, (K+1)*H] f32."""
    return lsgcl_forward_prepared(prepare_lsgcl(h, a_hat, weights, biases),
                                  norm=norm)


def gcn_norm_dense(edge_index, num_nodes):
    """Dense equivalent of torch_geometric's gcn_norm (add self-loops,
    symmetric normalization)."""
    src, dst = edge_index
    A = jnp.zeros((num_nodes, num_nodes), jnp.float32)
    A = A.at[src, dst].add(1.0)
    A = A + jnp.eye(num_nodes, dtype=jnp.float32)
    deg = A.sum(axis=1)
    d_inv_sqrt = jnp.where(deg > 0, 1.0 / jnp.sqrt(deg), 0.0)
    return d_inv_sqrt[:, None] * A * d_inv_sqrt[None, :]


def reference_forward_f32(h, a_hat, weights, biases, norm):
    """Plain-JAX f32 reference mirroring the PyTorch LSGCL.forward."""
    x = h
    outs = []
    for i in range(weights.shape[0]):
        if i > 0:
            x = a_hat @ x
        y = x @ weights[i] + biases[i]
        if norm == 1:
            y = y / jnp.maximum(
                jnp.sqrt(jnp.sum(y * y, axis=1, keepdims=True)), 1e-12)
        outs.append(y)
    return jnp.concatenate(outs, axis=1)


def reference_forward_bf16(h, a_hat, weights, biases, norm):
    """Plain-JAX reference with the same bf16-operand / f32-accumulate
    numerics as the kernel."""
    a_bf = a_hat.astype(jnp.bfloat16)
    w_bf = weights.astype(jnp.bfloat16)
    x = h.astype(jnp.bfloat16)
    outs = []
    for i in range(weights.shape[0]):
        if i > 0:
            x = jnp.dot(a_bf, x,
                        preferred_element_type=jnp.float32).astype(jnp.bfloat16)
        y = jnp.dot(x, w_bf[i], preferred_element_type=jnp.float32) + biases[i]
        if norm == 1:
            ss = jnp.sum(y * y, axis=1, keepdims=True)
            y = y * jax.lax.rsqrt(jnp.maximum(ss, 1e-24))
        outs.append(y)
    return jnp.concatenate(outs, axis=1)


if __name__ == "__main__":
    # Small shapes consistent with the module:
    #   N nodes, nfeat input features, eachdim hidden per layer, layer_num hops.
    N = 64
    nfeat = 32
    eachdim = 128
    layer_num = 2
    Norm = 1

    key = jax.random.PRNGKey(0)
    k_h, k_e, k_w, k_b = jax.random.split(key, 4)

    h = jax.random.normal(k_h, (N, nfeat), dtype=jnp.float32)

    # Random (symmetrized) edge_index [2, E].
    E = 256
    src = jax.random.randint(k_e, (E,), 0, N)
    dst = jax.random.randint(jax.random.fold_in(k_e, 1), (E,), 0, N)
    edge_index = jnp.stack(
        [jnp.concatenate([src, dst]), jnp.concatenate([dst, src])], axis=0)
    a_hat = gcn_norm_dense(edge_index, N)

    # Deterministic parameter init mimicking nn.Linear (uniform +-1/sqrt(fan_in)).
    bound = 1.0 / np.sqrt(nfeat)
    weights = jax.random.uniform(
        k_w, (layer_num + 1, nfeat, eachdim),
        minval=-bound, maxval=bound, dtype=jnp.float32)
    biases = jax.random.uniform(
        k_b, (layer_num + 1, eachdim),
        minval=-bound, maxval=bound, dtype=jnp.float32)

    # Pad / cast once (hoisted out of the per-forward path), then run.
    prep = prepare_lsgcl(h, a_hat, weights, biases)
    out = lsgcl_forward_prepared(prep, norm=Norm)
    out = jax.block_until_ready(out)
    assert out.shape == (N, (layer_num + 1) * eachdim)

    # Tight check against a reference with matching bf16/f32 numerics.
    ref_bf16 = reference_forward_bf16(h, a_hat, weights, biases, Norm)
    np.testing.assert_allclose(np.asarray(out), np.asarray(ref_bf16),
                               rtol=1e-2, atol=1e-3)

    # Loose sanity check against the pure-f32 forward (bf16 propagation error).
    ref_f32 = reference_forward_f32(h, a_hat, weights, biases, Norm)
    np.testing.assert_allclose(np.asarray(out), np.asarray(ref_f32),
                               rtol=0, atol=3e-2)

    # TODO(synk): projection/sim/semi_loss/loss (contrastive-loss helpers) are
    # not part of forward(); only the forward pass is implemented as a kernel.
    print("KERNEL_OK")
</pallas_src>

<mosaic_0001>
module attributes {stable_mosaic.version = 11 : i64} {
  func.func @lsgcl_kernel(%arg0: i32, %arg1: i32, %arg2: memref<128x128xbf16, #tpu.memory_space<vmem>>, %arg3: memref<128x128xbf16, #tpu.memory_space<vmem>>, %arg4: memref<1x128x128xbf16, #tpu.memory_space<vmem>>, %arg5: memref<1x1x128xf32, #tpu.memory_space<vmem>>, %arg6: memref<128x128xf32, #tpu.memory_space<vmem>>, %arg7: memref<2x128x128xbf16, #tpu.memory_space<vmem>>) attributes {dimension_semantics = [#tpu.dimension_semantics<arbitrary>, #tpu.dimension_semantics<arbitrary>], iteration_bounds = array<i64: 3, 1>, scalar_prefetch = 0 : i64, scratch_operands = 1 : i64, tpu.core_type = #tpu.core_type<tc>, window_params = [{pipeline_mode = #tpu.pipeline_mode<synchronous>, transform_indices = @transform_0, window_bounds = array<i64: 128, 128>}, {transform_indices = @transform_1, window_bounds = array<i64: 128, 128>}, {transform_indices = @transform_2, window_bounds = array<i64: 1, 128, 128>}, {transform_indices = @transform_3, window_bounds = array<i64: 1, 1, 128>}, {transform_indices = @transform_4, window_bounds = array<i64: 128, 128>}]} {
    %c128_i32 = arith.constant 128 : i32
    %0 = arith.muli %arg1, %c128_i32 : i32
    %1 = tpu.assume_multiple %0, 128 : i32
    %c2_i32 = arith.constant 2 : i32
    %c0_i32 = arith.constant 0 : i32
    %2 = arith.cmpi eq, %c2_i32, %c0_i32 : i32
    %c1_i32 = arith.constant 1 : i32
    %3 = arith.select %2, %c1_i32, %c2_i32 : i32
    %4 = arith.remsi %arg0, %3 : i32
    %c0_i32_0 = arith.constant 0 : i32
    %5 = arith.cmpi ne, %4, %c0_i32_0 : i32
    %c0_i32_1 = arith.constant 0 : i32
    %6 = arith.cmpi slt, %4, %c0_i32_1 : i32
    %c0_i32_2 = arith.constant 0 : i32
    %7 = arith.cmpi slt, %3, %c0_i32_2 : i32
    %8 = arith.xori %6, %7 : i1
    %9 = arith.andi %8, %5 : i1
    %10 = arith.addi %4, %3 : i32
    %11 = arith.select %9, %10, %4 : i32
    %c0_i32_3 = arith.constant 0 : i32
    %12 = arith.cmpi eq, %arg0, %c0_i32_3 : i32
    %13 = arith.extui %12 : i1 to i32
    %c0_i32_4 = arith.constant 0 : i32
    %14 = arith.cmpi ne, %13, %c0_i32_4 : i32
    scf.if %14 {
      %c0 = arith.constant 0 : index
      %c0_11 = arith.constant 0 : index
      %25 = vector.load %arg3[%c0, %c0_11] : memref<128x128xbf16, #tpu.memory_space<vmem>>, vector<128x128xbf16>
      %c0_12 = arith.constant 0 : index
      %26 = arith.index_cast %1 : i32 to index
      %c0_13 = arith.constant 0 : index
      %27 = vector.load %arg7[%c0_12, %26, %c0_13] : memref<2x128x128xbf16, #tpu.memory_space<vmem>>, vector<1x128x128xbf16>
      %28 = vector.shape_cast %27 : vector<1x128x128xbf16> to vector<128x128xbf16>
      %29 = vector.shape_cast %25 : vector<128x128xbf16> to vector<1x128x128xbf16>
      tpu.vector_store %arg7[%c0_12, %26, %c0_13], %29 {strides = array<i32>} : memref<2x128x128xbf16, #tpu.memory_space<vmem>>, vector<1x128x128xbf16>,
      %c0_14 = arith.constant 0 : index
      %c0_15 = arith.constant 0 : index
      %c0_16 = arith.constant 0 : index
      %30 = vector.load %arg4[%c0_14, %c0_15, %c0_16] : memref<1x128x128xbf16, #tpu.memory_space<vmem>>, vector<1x128x128xbf16>
      %31 = vector.shape_cast %30 : vector<1x128x128xbf16> to vector<128x128xbf16>
      %cst = arith.constant dense<0.000000e+00> : vector<128x128xf32>
      %32 = tpu.matmul %25, %31, %cst {dimension_numbers = #tpu.dot_dimension_numbers<[1], [0], [0], [1], [0, 0, 1, 1], [], []>} : vector<128x128xbf16>, vector<128x128xbf16>, vector<128x128xf32> -> vector<128x128xf32>
      %c0_17 = arith.constant 0 : index
      %c0_18 = arith.constant 0 : index
      %c0_19 = arith.constant 0 : index
      %33 = vector.load %arg5[%c0_17, %c0_18, %c0_19] : memref<1x1x128xf32, #tpu.memory_space<vmem>>, vector<1x1x128xf32>
      %34 = vector.shape_cast %33 : vector<1x1x128xf32> to vector<1x128xf32>
      %35 = vector.broadcast %34 : vector<1x128xf32> to vector<128x128xf32>
      %36 = arith.addf %32, %35 : vector<128x128xf32>
      %37 = arith.mulf %36, %36 : vector<128x128xf32>
      %cst_20 = arith.constant dense<0.000000e+00> : vector<128xf32>
      %38 = vector.multi_reduction <add>, %37, %cst_20 [1] : vector<128x128xf32> to vector<128xf32>
      %39 = vector.shape_cast %38 : vector<128xf32> to vector<128x1xf32>
      %cst_21 = arith.constant 1.000000e-24 : f32
      %40 = vector.broadcast %cst_21 : f32 to vector<128x1xf32>
      %41 = arith.maximumf %39, %40 : vector<128x1xf32>
      %42 = math.rsqrt %41 : vector<128x1xf32>
      %43 = vector.broadcast %42 : vector<128x1xf32> to vector<128x128xf32>
      %44 = arith.mulf %36, %43 : vector<128x128xf32>
      %c0_22 = arith.constant 0 : index
      %c0_23 = arith.constant 0 : index
      %45 = vector.load %arg6[%c0_22, %c0_23] : memref<128x128xf32, #tpu.memory_space<vmem>>, vector<128x128xf32>
      tpu.vector_store %arg6[%c0_22, %c0_23], %44 {strides = array<i32>} : memref<128x128xf32, #tpu.memory_space<vmem>>, vector<128x128xf32>,
    } else {
    }
    %c0_i32_5 = arith.constant 0 : i32
    %15 = arith.cmpi sgt, %arg0, %c0_i32_5 : i32
    %c0_i32_6 = arith.constant 0 : i32
    %16 = arith.cmpi eq, %11, %c0_i32_6 : i32
    %17 = arith.andi %15, %16 : i1
    %18 = arith.extui %17 : i1 to i32
    %c0_i32_7 = arith.constant 0 : i32
    %19 = arith.cmpi ne, %18, %c0_i32_7 : i32
    scf.if %19 {
      %25 = arith.index_cast %1 : i32 to index
      %c0 = arith.constant 0 : index
      %26 = vector.load %arg2[%25, %c0] : memref<128x128xbf16, #tpu.memory_space<vmem>>, vector<128x128xbf16>
      %c1 = arith.constant 1 : index
      %c0_11 = arith.constant 0 : index
      %c0_12 = arith.constant 0 : index
      %27 = vector.load %arg7[%c1, %c0_11, %c0_12] : memref<2x128x128xbf16, #tpu.memory_space<vmem>>, vector<1x128x128xbf16>
      %28 = vector.shape_cast %27 : vector<1x128x128xbf16> to vector<128x128xbf16>
      %cst = arith.constant dense<0.000000e+00> : vector<128x128xf32>
      %29 = tpu.matmul %26, %28, %cst {dimension_numbers = #tpu.dot_dimension_numbers<[1], [0], [0], [1], [0, 0, 1, 1], [], []>} : vector<128x128xbf16>, vector<128x128xbf16>, vector<128x128xf32> -> vector<128x128xf32>
      %30 = arith.truncf %29 : vector<128x128xf32> to vector<128x128xbf16>
      %c0_13 = arith.constant 0 : index
      %31 = arith.index_cast %1 : i32 to index
      %c0_14 = arith.constant 0 : index
      %32 = vector.load %arg7[%c0_13, %31, %c0_14] : memref<2x128x128xbf16, #tpu.memory_space<vmem>>, vector<1x128x128xbf16>
      %33 = vector.shape_cast %32 : vector<1x128x128xbf16> to vector<128x128xbf16>
      %34 = vector.shape_cast %30 : vector<128x128xbf16> to vector<1x128x128xbf16>
      tpu.vector_store %arg7[%c0_13, %31, %c0_14], %34 {strides = array<i32>} : memref<2x128x128xbf16, #tpu.memory_space<vmem>>, vector<1x128x128xbf16>,
      %c0_15 = arith.constant 0 : index
      %c0_16 = arith.constant 0 : index
      %c0_17 = arith.constant 0 : index
      %35 = vector.load %arg4[%c0_15, %c0_16, %c0_17] : memref<1x128x128xbf16, #tpu.memory_space<vmem>>, vector<1x128x128xbf16>
      %36 = vector.shape_cast %35 : vector<1x128x128xbf16> to vector<128x128xbf16>
      %cst_18 = arith.constant dense<0.000000e+00> : vector<128x128xf32>
      %37 = tpu.matmul %30, %36, %cst_18 {dimension_numbers = #tpu.dot_dimension_numbers<[1], [0], [0], [1], [0, 0, 1, 1], [], []>} : vector<128x128xbf16>, vector<128x128xbf16>, vector<128x128xf32> -> vector<128x128xf32>
      %c0_19 = arith.constant 0 : index
      %c0_20 = arith.constant 0 : index
      %c0_21 = arith.constant 0 : index
      %38 = vector.load %arg5[%c0_19, %c0_20, %c0_21] : memref<1x1x128xf32, #tpu.memory_space<vmem>>, vector<1x1x128xf32>
      %39 = vector.shape_cast %38 : vector<1x1x128xf32> to vector<1x128xf32>
      %40 = vector.broadcast %39 : vector<1x128xf32> to vector<128x128xf32>
      %41 = arith.addf %37, %40 : vector<128x128xf32>
      %42 = arith.mulf %41, %41 : vector<128x128xf32>
      %cst_22 = arith.constant dense<0.000000e+00> : vector<128xf32>
      %43 = vector.multi_reduction <add>, %42, %cst_22 [1] : vector<128x128xf32> to vector<128xf32>
      %44 = vector.shape_cast %43 : vector<128xf32> to vector<128x1xf32>
      %cst_23 = arith.constant 1.000000e-24 : f32
      %45 = vector.broadcast %cst_23 : f32 to vector<128x1xf32>
      %46 = arith.maximumf %44, %45 : vector<128x1xf32>
      %47 = math.rsqrt %46 : vector<128x1xf32>
      %48 = vector.broadcast %47 : vector<128x1xf32> to vector<128x128xf32>
      %49 = arith.mulf %41, %48 : vector<128x128xf32>
      %c0_24 = arith.constant 0 : index
      %c0_25 = arith.constant 0 : index
      %50 = vector.load %arg6[%c0_24, %c0_25] : memref<128x128xf32, #tpu.memory_space<vmem>>, vector<128x128xf32>
      tpu.vector_store %arg6[%c0_24, %c0_25], %49 {strides = array<i32>} : memref<128x128xf32, #tpu.memory_space<vmem>>, vector<128x128xf32>,
    } else {
    }
    %c0_i32_8 = arith.constant 0 : i32
    %20 = arith.cmpi sgt, %arg0, %c0_i32_8 : i32
    %c1_i32_9 = arith.constant 1 : i32
    %21 = arith.cmpi eq, %11, %c1_i32_9 : i32
    %22 = arith.andi %20, %21 : i1
    %23 = arith.extui %22 : i1 to i32
    %c0_i32_10 = arith.constant 0 : i32
    %24 = arith.cmpi ne, %23, %c0_i32_10 : i32
    scf.if %24 {
      %25 = arith.index_cast %1 : i32 to index
      %c0 = arith.constant 0 : index
      %26 = vector.load %arg2[%25, %c0] : memref<128x128xbf16, #tpu.memory_space<vmem>>, vector<128x128xbf16>
      %c0_11 = arith.constant 0 : index
      %c0_12 = arith.constant 0 : index
      %c0_13 = arith.constant 0 : index
      %27 = vector.load %arg7[%c0_11, %c0_12, %c0_13] : memref<2x128x128xbf16, #tpu.memory_space<vmem>>, vector<1x128x128xbf16>
      %28 = vector.shape_cast %27 : vector<1x128x128xbf16> to vector<128x128xbf16>
      %cst = arith.constant dense<0.000000e+00> : vector<128x128xf32>
      %29 = tpu.matmul %26, %28, %cst {dimension_numbers = #tpu.dot_dimension_numbers<[1], [0], [0], [1], [0, 0, 1, 1], [], []>} : vector<128x128xbf16>, vector<128x128xbf16>, vector<128x128xf32> -> vector<128x128xf32>
      %30 = arith.truncf %29 : vector<128x128xf32> to vector<128x128xbf16>
      %c1 = arith.constant 1 : index
      %31 = arith.index_cast %1 : i32 to index
      %c0_14 = arith.constant 0 : index
      %32 = vector.load %arg7[%c1, %31, %c0_14] : memref<2x128x128xbf16, #tpu.memory_space<vmem>>, vector<1x128x128xbf16>
      %33 = vector.shape_cast %32 : vector<1x128x128xbf16> to vector<128x128xbf16>
      %34 = vector.shape_cast %30 : vector<128x128xbf16> to vector<1x128x128xbf16>
      tpu.vector_store %arg7[%c1, %31, %c0_14], %34 {strides = array<i32>} : memref<2x128x128xbf16, #tpu.memory_space<vmem>>, vector<1x128x128xbf16>,
      %c0_15 = arith.constant 0 : index
      %c0_16 = arith.constant 0 : index
      %c0_17 = arith.constant 0 : index
      %35 = vector.load %arg4[%c0_15, %c0_16, %c0_17] : memref<1x128x128xbf16, #tpu.memory_space<vmem>>, vector<1x128x128xbf16>
      %36 = vector.shape_cast %35 : vector<1x128x128xbf16> to vector<128x128xbf16>
      %cst_18 = arith.constant dense<0.000000e+00> : vector<128x128xf32>
      %37 = tpu.matmul %30, %36, %cst_18 {dimension_numbers = #tpu.dot_dimension_numbers<[1], [0], [0], [1], [0, 0, 1, 1], [], []>} : vector<128x128xbf16>, vector<128x128xbf16>, vector<128x128xf32> -> vector<128x128xf32>
      %c0_19 = arith.constant 0 : index
      %c0_20 = arith.constant 0 : index
      %c0_21 = arith.constant 0 : index
      %38 = vector.load %arg5[%c0_19, %c0_20, %c0_21] : memref<1x1x128xf32, #tpu.memory_space<vmem>>, vector<1x1x128xf32>
      %39 = vector.shape_cast %38 : vector<1x1x128xf32> to vector<1x128xf32>
      %40 = vector.broadcast %39 : vector<1x128xf32> to vector<128x128xf32>
      %41 = arith.addf %37, %40 : vector<128x128xf32>
      %42 = arith.mulf %41, %41 : vector<128x128xf32>
      %cst_22 = arith.constant dense<0.000000e+00> : vector<128xf32>
      %43 = vector.multi_reduction <add>, %42, %cst_22 [1] : vector<128x128xf32> to vector<128xf32>
      %44 = vector.shape_cast %43 : vector<128xf32> to vector<128x1xf32>
      %cst_23 = arith.constant 1.000000e-24 : f32
      %45 = vector.broadcast %cst_23 : f32 to vector<128x1xf32>
      %46 = arith.maximumf %44, %45 : vector<128x1xf32>
      %47 = math.rsqrt %46 : vector<128x1xf32>
      %48 = vector.broadcast %47 : vector<128x1xf32> to vector<128x128xf32>
      %49 = arith.mulf %41, %48 : vector<128x128xf32>
      %c0_24 = arith.constant 0 : index
      %c0_25 = arith.constant 0 : index
      %50 = vector.load %arg6[%c0_24, %c0_25] : memref<128x128xf32, #tpu.memory_space<vmem>>, vector<128x128xf32>
      tpu.vector_store %arg6[%c0_24, %c0_25], %49 {strides = array<i32>} : memref<128x128xf32, #tpu.memory_space<vmem>>, vector<128x128xf32>,
    } else {
    }
    return
  }
  func.func @transform_0(%arg0: i32, %arg1: i32) -> (i32, i32) {
    %c0_i32 = arith.constant 0 : i32
    %c0_i32_0 = arith.constant 0 : i32
    %c0_i32_1 = arith.constant 0 : i32
    return %c0_i32, %c0_i32_0 : i32, i32
  }
  func.func @transform_1(%arg0: i32, %arg1: i32) -> (i32, i32) {
    %c0_i32 = arith.constant 0 : i32
    %0 = arith.cmpi eq, %arg0, %c0_i32 : i32
    %c0_i32_0 = arith.constant 0 : i32
    %1 = arith.select %0, %arg1, %c0_i32_0 : i32
    %c0_i32_1 = arith.constant 0 : i32
    %c0_i32_2 = arith.constant 0 : i32
    return %1, %c0_i32_1 : i32, i32
  }
  func.func @transform_2(%arg0: i32, %arg1: i32) -> (i32, i32, i32) {
    %c0_i32 = arith.constant 0 : i32
    %c0_i32_0 = arith.constant 0 : i32
    %c0_i32_1 = arith.constant 0 : i32
    return %arg0, %c0_i32, %c0_i32_0 : i32, i32, i32
  }
  func.func @transform_3(%arg0: i32, %arg1: i32) -> (i32, i32, i32) {
    %c0_i32 = arith.constant 0 : i32
    %c0_i32_0 = arith.constant 0 : i32
    %c0_i32_1 = arith.constant 0 : i32
    return %arg0, %c0_i32, %c0_i32_0 : i32, i32, i32
  }
  func.func @transform_4(%arg0: i32, %arg1: i32) -> (i32, i32) {
    %c0_i32 = arith.constant 0 : i32
    return %arg1, %arg0 : i32, i32
  }
}

</mosaic_0001>

<llo_original>
// kernel: tpu_custom_call.1
$region0: #{tpu_custom_call.1}
  #allocation0 [shape = 'u32[]', space=smem, size = 0x4, offset = 0x4, fixed_abs, tag = 'smem constant byte address 0x4 - core index']
  #allocation1 [shape = 'u32[144,128]{1,0:T(1,128)}', space=vmem, size = 0x12000, scoped, tag = 'internal scratch']
  #allocation2 [shape = 'bf16[2,128,128]{2,1,0:T(8,128)(2,1)}', space=vmem, size = 0x10000, scoped, tag = 'scratch operand']
  %s0 = inlined_call_operand.hbm [shape: bf16[128,128], index: 0, kind: input, shape index: {}]
  %s1 = inlined_call_operand.hbm [shape: bf16[128,128], index: 1, kind: input, shape index: {}]
  %s2 = inlined_call_operand.hbm [shape: bf16[3,128,128], index: 2, kind: input, shape index: {}]
  %s3 = inlined_call_operand.vmem [shape: f32[3,1,128], index: 3, kind: input, shape index: {}]
  %s4 = inlined_call_operand.hbm [shape: f32[128,384], index: 4, kind: output, shape index: {}]
  %s5 = sld [smem:[#allocation0]]
  $region73: #{tpu_custom_call.1} parent=0
    _
  %s7 = ssub.s32 1, %s5
  %s8 = scalar_select 0, %s7, %s5
  $region1: #{tpu_custom_call.1} parent=0
    #allocation3 [shape = 'u8[32768]{0}', space=vmem, size = 0x8000, scoped, tag = 'input window, operand 0, single buffered']
    #allocation4 [shape = 's32[2]{0}', space=sflag, size = 0x8, scoped, tag = 'scoped memory for tpu_custom_call.1']
    #allocation5 [shape = 's32[2]{0}', space=sflag, size = 0x8, scoped, tag = 'scoped memory for tpu_custom_call.1']
    #allocation6 [shape = 'u8[65536]{0}', space=vmem, size = 0x10000, scoped, tag = 'input window, operand 1']
    #allocation7 [shape = 's32[2]{0}', space=sflag, size = 0x8, scoped, tag = 'scoped memory for tpu_custom_call.1']
    #allocation8 [shape = 'u8[65536]{0}', space=vmem, size = 0x10000, scoped, tag = 'input window, operand 2']
    #allocation9 [shape = 'u8[131072]{0}', space=vmem, size = 0x20000, scoped, tag = 'output window, operand 0']
    %9 = vsyncpa [#allocation4], 0
    %10 = vsyncpa [#allocation7], 0
    %s11 = scalar_lea.sflag [#allocation7], 1
    %12 = vsyncpa %s11, 0
    %13 = vsyncpa [#allocation5], 0
    %s14 = scalar_lea.sflag [#allocation5], 1
    %15 = vsyncpa %s14, 0
    loop: start=0, step=1, limit=5
    $region2: #{tpu_custom_call.1} parent=1 // loop_pre_header
      _
    $region3: #{tpu_custom_call.1} parent=1 // loop_header
      %s17 = sphi 0, %s21
      %p18 = scmp.ge.s32.totalorder %s17, 5
      %s24 = sphi 0, %s36
      %s25 = sphi 0, %s32
      %s26 = sphi 0, %s24
      %s27 = sphi 0, %s25
      %s28 = sphi 0, %s26
      %s29 = sphi 0, %s27
      %s37 = sphi 0, %s37
      %s39 = sphi 0, %s37
      %s40 = sphi 0, %s39
      %s54 = sphi 0, %s40
      %s64 = sphi 0, %s66
      %s67 = sphi 0, %s64
      %s68 = sphi 0, %s67
      %s84 = sphi 0, %s68
      %s90 = sphi 0, %s92
      %s93 = sphi 0, %s90
      %s94 = sphi 0, %s93
      %s110 = sphi 0, %s94
      %s116 = sphi 0, %s118
      %s119 = sphi 0, %s116
      %s120 = sphi 0, %s119
      %s136 = sphi 0, %s120
      %s144 = sphi 0, %s146
      %s147 = sphi 0, %s144
      %s148 = sphi 0, %s147
      %s164 = sphi 0, %s148
    $region4: #{tpu_custom_call.1} parent=1 // loop_header_branch
      %20 = sbr.rel (%p18) target = $region8
    $region5: #{tpu_custom_call.1} parent=1 // loop_body
      %s22 = ssub.s32 %s17, 1
      %s23 = ssub.s32 %s17, 2
      %s30 = sadd.s32 1, %s25
      %p31 = scmp.ge.s32.totalorder %s30, 1
      %s32 = scalar_select %p31, 0, %s30
      %s33 = sadd.s32 1, %s24
      %s34 = scalar_select %p31, %s33, %s24
      %p35 = scmp.ge.s32.totalorder %s34, 3
      %s36 = scalar_select %p35, 0, %s34
      %s38 = sadd.s32 %s37, 1
      %p41 = scmp.eq.s32.totalorder %s17, 2
      %p42 = scmp.ne.s32.totalorder %s37, %s39
      %p43 = scmp.eq.s32.totalorder %s17, 0
      %p44 = por %p42, %p43
      %p45 = scmp.ne.s32.totalorder %s37, %s39
      %p46 = scmp.eq.s32.totalorder %s22, 2
      %p47 = por %p45, %p46
      %p48 = scmp.ne.s32.totalorder %s39, %s40
      %p49 = scmp.eq.s32.totalorder %s22, 0
      %p50 = por %p48, %p49
      %p51 = scmp.ne.s32.totalorder %s39, %s40
      %p52 = scmp.eq.s32.totalorder %s23, 2
      %p53 = por %p51, %p52
      %p55 = scmp.ne.s32.totalorder %s40, %s54
      %p56 = scmp.eq.s32.totalorder %s23, 0
      %p57 = por %p55, %p56
      %p58 = scmp.eq.s32.totalorder %s24, 0
      %s59 = scalar_select %p58, %s25, 0
      %p60 = scmp.eq.s32.totalorder %s36, 0
      %s61 = scalar_select %p60, %s32, 0
      %s62 = ssub.s32 %s59, %s61
      %p63 = scmp.eq.s32.totalorder %s62, 0
      %s65 = sadd.s32 %s64, 1
      %s66 = scalar_select %p63, %s64, %s65
      %p69 = pneg %p63
      %p70 = scmp.eq.s32.totalorder %s17, 2
      %p71 = por %p69, %p70
      %p72 = scmp.ne.s32.totalorder %s64, %s67
      %p73 = scmp.eq.s32.totalorder %s17, 0
      %p74 = por %p72, %p73
      %p75 = scmp.ne.s32.totalorder %s64, %s67
      %p76 = scmp.eq.s32.totalorder %s22, 2
      %p77 = por %p75, %p76
      %p78 = scmp.ne.s32.totalorder %s67, %s68
      %p79 = scmp.eq.s32.totalorder %s22, 0
      %p80 = por %p78, %p79
      %p81 = scmp.ne.s32.totalorder %s67, %s68
      %p82 = scmp.eq.s32.totalorder %s23, 2
      %p83 = por %p81, %p82
      %p85 = scmp.ne.s32.totalorder %s68, %s84
      %p86 = scmp.eq.s32.totalorder %s23, 0
      %p87 = por %p85, %p86
      %s88 = ssub.s32 %s24, %s36
      %p89 = scmp.eq.s32.totalorder %s88, 0
      %s91 = sadd.s32 %s90, 1
      %s92 = scalar_select %p89, %s90, %s91
      %p95 = pneg %p89
      %p96 = scmp.eq.s32.totalorder %s17, 2
      %p97 = por %p95, %p96
      %p98 = scmp.ne.s32.totalorder %s90, %s93
      %p99 = scmp.eq.s32.totalorder %s17, 0
      %p100 = por %p98, %p99
      %p101 = scmp.ne.s32.totalorder %s90, %s93
      %p102 = scmp.eq.s32.totalorder %s22, 2
      %p103 = por %p101, %p102
      %p104 = scmp.ne.s32.totalorder %s93, %s94
      %p105 = scmp.eq.s32.totalorder %s22, 0
      %p106 = por %p104, %p105
      %p107 = scmp.ne.s32.totalorder %s93, %s94
      %p108 = scmp.eq.s32.totalorder %s23, 2
      %p109 = por %p107, %p108
      %p111 = scmp.ne.s32.totalorder %s94, %s110
      %p112 = scmp.eq.s32.totalorder %s23, 0
      %p113 = por %p111, %p112
      %s114 = ssub.s32 %s24, %s36
      %p115 = scmp.eq.s32.totalorder %s114, 0
      %s117 = sadd.s32 %s116, 1
      %s118 = scalar_select %p115, %s116, %s117
      %p121 = pneg %p115
      %p122 = scmp.eq.s32.totalorder %s17, 2
      %p123 = por %p121, %p122
      %p124 = scmp.ne.s32.totalorder %s116, %s119
      %p125 = scmp.eq.s32.totalorder %s17, 0
      %p126 = por %p124, %p125
      %p127 = scmp.ne.s32.totalorder %s116, %s119
      %p128 = scmp.eq.s32.totalorder %s22, 2
      %p129 = por %p127, %p128
      %p130 = scmp.ne.s32.totalorder %s119, %s120
      %p131 = scmp.eq.s32.totalorder %s22, 0
      %p132 = por %p130, %p131
      %p133 = scmp.ne.s32.totalorder %s119, %s120
      %p134 = scmp.eq.s32.totalorder %s23, 2
      %p135 = por %p133, %p134
      %p137 = scmp.ne.s32.totalorder %s120, %s136
      %p138 = scmp.eq.s32.totalorder %s23, 0
      %p139 = por %p137, %p138
      %s140 = ssub.s32 %s25, %s32
      %s141 = ssub.s32 %s24, %s36
      %s142 = sor.u32 %s140, %s141
      %p143 = scmp.eq.s32.totalorder %s142, 0
      %s145 = sadd.s32 %s144, 1
      %s146 = scalar_select %p143, %s144, %s145
      %p149 = pneg %p143
      %p150 = scmp.eq.s32.totalorder %s17, 2
      %p151 = por %p149, %p150
      %p152 = scmp.ne.s32.totalorder %s144, %s147
      %p153 = scmp.eq.s32.totalorder %s17, 0
      %p154 = por %p152, %p153
      %p155 = scmp.ne.s32.totalorder %s144, %s147
      %p156 = scmp.eq.s32.totalorder %s22, 2
      %p157 = por %p155, %p156
      %p158 = scmp.ne.s32.totalorder %s147, %s148
      %p159 = scmp.eq.s32.totalorder %s22, 0
      %p160 = por %p158, %p159
      %p161 = scmp.ne.s32.totalorder %s147, %s148
      %p162 = scmp.eq.s32.totalorder %s23, 2
      %p163 = por %p161, %p162
      %p165 = scmp.ne.s32.totalorder %s148, %s164
      %p166 = scmp.eq.s32.totalorder %s23, 0
      %p167 = por %p165, %p166
      %p168 = scmp.le.s32.totalorder 1, %s17
      %p169 = scmp.lt.s32.totalorder %s17, 4
      %p170 = pnand %p168, %p169
      %p171 = pneg %p170
      // Predicated region
      $region9: #{tpu_custom_call.1} parent=5 // pred_check
        _
      $region10: #{tpu_custom_call.1} parent=5 // pred_check_branch
        %173 = sbr.rel (%p170) target = $region12
      $region11: #{tpu_custom_call.1} parent=5 // pred_region
        %s174 = ssub.s32 %s17, 1
        // Predicated region
        $region13: #{tpu_custom_call.1} parent=11 // pred_check
          %p175 = pneg %p50
        $region14: #{tpu_custom_call.1} parent=11 // pred_check_branch
          %177 = sbr.rel (%p175) target = $region16
        $region15: #{tpu_custom_call.1} parent=11 // pred_region
          %s179 = ssub.s32 1024, 1024
          %180 = vsyncadd [#allocation4], %s179
          %s181 = sshll.u32 [#allocation3], 4
          %s182 = int_to_ptr.vmem [resolvable:$true] %s181
          %187 = dma.hbm_to_vmem [thread:$0]  %s0, 1024, %s182, [#allocation4], 64, 64, 4
        $region16: #{tpu_custom_call.1} parent=11 // pred_fallthru
          _
      $region12: #{tpu_custom_call.1} parent=5 // pred_fallthru
        _
      %p188 = scmp.lt.s32.totalorder %s17, 3
      // Predicated region
      $region17: #{tpu_custom_call.1} parent=5 // pred_check
        %p189 = pneg %p188
      $region18: #{tpu_custom_call.1} parent=5 // pred_check_branch
        %191 = sbr.rel (%p189) target = $region20
      $region19: #{tpu_custom_call.1} parent=5 // pred_region
        // Predicated region
        $region21: #{tpu_custom_call.1} parent=19 // pred_check
          %p192 = pneg %p74
        $region22: #{tpu_custom_call.1} parent=19 // pred_check_branch
          %194 = sbr.rel (%p192) target = $region24
        $region23: #{tpu_custom_call.1} parent=19 // pred_region
          %s195 = sand.u32 %s17, 1
          %s196 = scalar_lea.sflag [#allocation7], %s195
          %s197 = sand.u32 %s64, 1
          %s198 = smul.addr %s197, 64
          %s199 = scalar_lea.vmem [#allocation6], %s198
          %p200 = scmp.eq.s32.totalorder %s24, 0
          %s201 = scalar_select %p200, %s25, 0
          %s202 = smul.u32 16, %s201
          %s204 = ssub.s32 1024, 1024
          %205 = vsyncadd %s196, %s204
          %s206 = smul.addr %s202, 64
          %s207 = scalar_lea.hbm %s1, %s206
          %s208 = sshll.u32 %s199, 4
          %s209 = int_to_ptr.vmem [resolvable:$true] %s208
          %214 = dma.hbm_to_vmem [thread:$0]  %s207, 1024, %s209, %s196, 64, 64, 4
        $region24: #{tpu_custom_call.1} parent=19 // pred_fallthru
          _
        // Predicated region
        $region25: #{tpu_custom_call.1} parent=19 // pred_check
          %p215 = pneg %p100
        $region26: #{tpu_custom_call.1} parent=19 // pred_check_branch
          %217 = sbr.rel (%p215) target = $region28
        $region27: #{tpu_custom_call.1} parent=19 // pred_region
          %s218 = sand.u32 %s17, 1
          %s219 = scalar_lea.sflag [#allocation7], %s218
          %s220 = sand.u32 %s90, 1
          %s221 = smul.addr %s220, 64
          %s222 = scalar_lea.vmem [#allocation8], %s221
          %s224 = ssub.s32 1024, 1024
          %225 = vsyncadd %s219, %s224
          %s226 = smul.addr %s24, 16
          %s227 = smul.addr %s226, 64
          %s228 = scalar_lea.hbm %s2, %s227
          %s229 = sshll.u32 %s222, 4
          %s230 = int_to_ptr.vmem [resolvable:$true] %s229
          %235 = dma.hbm_to_vmem [thread:$0]  %s228, 1024, %s230, %s219, 64, 64, 4
        $region28: #{tpu_custom_call.1} parent=19 // pred_fallthru
          _
        // Predicated region
        $region29: #{tpu_custom_call.1} parent=19 // pred_check
          %p236 = pneg %p126
        $region30: #{tpu_custom_call.1} parent=19 // pred_check_branch
          %238 = sbr.rel (%p236) target = $region32
        $region31: #{tpu_custom_call.1} parent=19 // pred_region
          %p239 = scmp.lt.s32.totalorder %s24, 2
          %s240 = scalar_select %p239, %s24, 2
          %s241 = scalar_lea.vmem %s3, %s240
        $region32: #{tpu_custom_call.1} parent=19 // pred_fallthru
          _
      $region20: #{tpu_custom_call.1} parent=5 // pred_fallthru
        _
      %p242 = scmp.le.s32.totalorder 1, %s17
      %p243 = scmp.lt.s32.totalorder %s17, 4
      %p244 = pnand %p242, %p243
      %p245 = pneg %p244
      // Predicated region
      $region33: #{tpu_custom_call.1} parent=5 // pred_check
        _
      $region34: #{tpu_custom_call.1} parent=5 // pred_check_branch
        %247 = sbr.rel (%p244) target = $region36
      $region35: #{tpu_custom_call.1} parent=5 // pred_region
        %s248 = ssub.s32 %s17, 1
        // Predicated region
        $region37: #{tpu_custom_call.1} parent=35 // pred_check
          %p249 = pneg %p50
        $region38: #{tpu_custom_call.1} parent=35 // pred_check_branch
          %251 = sbr.rel (%p249) target = $region40
        $region39: #{tpu_custom_call.1} parent=35 // pred_region
          %252 = dma.done [#allocation4], 1024
        $region40: #{tpu_custom_call.1} parent=35 // pred_fallthru
          _
        %s253 = sand.u32 %s22, 1
        %s254 = scalar_lea.sflag [#allocation7], %s253
        %s255 = sand.u32 %s67, 1
        %s256 = smul.addr %s255, 64
        %s257 = scalar_lea.vmem [#allocation6], %s256
        // Predicated region
        $region41: #{tpu_custom_call.1} parent=35 // pred_check
          %p258 = pneg %p80
        $region42: #{tpu_custom_call.1} parent=35 // pred_check_branch
          %260 = sbr.rel (%p258) target = $region44
        $region43: #{tpu_custom_call.1} parent=35 // pred_region
          %261 = dma.done %s254, 1024
        $region44: #{tpu_custom_call.1} parent=35 // pred_fallthru
          _
        %s262 = sand.u32 %s22, 1
        %s263 = scalar_lea.sflag [#allocation7], %s262
        %s264 = sand.u32 %s93, 1
        %s265 = smul.addr %s264, 64
        %s266 = scalar_lea.vmem [#allocation8], %s265
        // Predicated region
        $region45: #{tpu_custom_call.1} parent=35 // pred_check
          %p267 = pneg %p106
        $region46: #{tpu_custom_call.1} parent=35 // pred_check_branch
          %269 = sbr.rel (%p267) target = $region48
        $region47: #{tpu_custom_call.1} parent=35 // pred_region
          %270 = dma.done %s263, 1024
        $region48: #{tpu_custom_call.1} parent=35 // pred_fallthru
          _
        %p271 = pneg %p50
        %p272 = pneg %p47
        %s273 = sand.u32 %s22, 1
        %s274 = scalar_lea.sflag [#allocation7], %s273
        %s275 = sand.u32 %s67, 1
        %s276 = smul.addr %s275, 64
        %s277 = scalar_lea.vmem [#allocation6], %s276
        %p278 = pneg %p80
        %p279 = pneg %p77
        %s280 = sand.u32 %s22, 1
        %s281 = scalar_lea.sflag [#allocation7], %s280
        %s282 = sand.u32 %s93, 1
        %s283 = smul.addr %s282, 64
        %s284 = scalar_lea.vmem [#allocation8], %s283
        %p285 = pneg %p106
        %p286 = pneg %p103
        %p287 = scmp.lt.s32.totalorder %s26, 2
        %s288 = scalar_select %p287, %s26, 2
        %s289 = scalar_lea.vmem %s3, %s288
        %p290 = pneg %p132
        %p291 = pneg %p129
        %p292 = pneg %p160
        %p293 = pneg %p157
        %s294 = sand.u32 %s147, 1
        %s295 = scalar_lea.sflag [#allocation5], %s294
        %s296 = sand.u32 %s147, 1
        %s297 = smul.addr %s296, 128
        %s298 = scalar_lea.vmem [#allocation9], %s297
        %p299 = scmp.eq.s32.totalorder %s26, 0
        %s300 = scalar_select %p299, %s27, 0
        %s301 = smul.u32 16, %s300
        %p302 = scmp.lt.s32.totalorder %s26, 2
        %s303 = scalar_select %p302, %s26, 2
        %s304 = scalar_lea.vmem %s3, %s303
        %s305 = smul.u32 16, %s27
        %s307 = smul.u32 %s27, 128
        %p308 = scmp.lt.s32.totalorder %s26, 0
        %s309 = ssub.s32 0, %s26
        %s310 = scalar_select %p308, %s309, %s26
        %s311 = sand.u32 %s310, 1
        %s312 = ssub.s32 0, %s311
        %s313 = scalar_select %p308, %s312, %s311
        %p314 = scmp.ne.s32.totalorder %s313, 0
        %p315 = scmp.lt.s32.totalorder %s313, 0
        %p316 = pnand %p315, %p314
        %p317 = pneg %p316
        %s318 = sadd.s32 %s313, 2
        %s319 = scalar_select %p317, %s318, %s313
        %p320 = scmp.eq.s32.totalorder %s26, 0
        // Predicated region
        $region49: #{tpu_custom_call.1} parent=35 // pred_check
          %p321 = pneg %p320
        $region50: #{tpu_custom_call.1} parent=35 // pred_check_branch
          %323 = sbr.rel (%p321) target = $region52
        $region51: #{tpu_custom_call.1} parent=35 // pred_region
          %v324 = vld [vmem:[%s257] sm:$0xf]
          %v325 = vld [vmem:[%s257 + $0x4] sm:$0xf]
          %v326 = vld [vmem:[%s257 + $0x8] sm:$0xf]
          %v327 = vld [vmem:[%s257 + $0xc] sm:$0xf]
          %v328 = vld [vmem:[%s257 + $0x10] sm:$0xf]
          %v329 = vld [vmem:[%s257 + $0x14] sm:$0xf]
          %v330 = vld [vmem:[%s257 + $0x18] sm:$0xf]
          %v331 = vld [vmem:[%s257 + $0x1c] sm:$0xf]
          %v332 = vld [vmem:[%s257 + $0x20] sm:$0xf]
          %v333 = vld [vmem:[%s257 + $0x24] sm:$0xf]
          %v334 = vld [vmem:[%s257 + $0x28] sm:$0xf]
          %v335 = vld [vmem:[%s257 + $0x2c] sm:$0xf]
          %v336 = vld [vmem:[%s257 + $0x30] sm:$0xf]
          %v337 = vld [vmem:[%s257 + $0x34] sm:$0xf]
          %v338 = vld [vmem:[%s257 + $0x38] sm:$0xf]
          %v339 = vld [vmem:[%s257 + $0x3c] sm:$0xf]
          %s340 = sshra.s32 %s307, 3
          %s341 = sand.u32 %s307, 7
          %s342 = smul.addr %s340, 4
          %s343 = scalar_lea.vmem [#allocation2], %s342
          %344 = vst [vmem:[%s343] sm:$0xf] %v324
          %345 = vst [vmem:[%s343 + $0x4] sm:$0xf] %v325
          %346 = vst [vmem:[%s343 + $0x8] sm:$0xf] %v326
          %347 = vst [vmem:[%s343 + $0xc] sm:$0xf] %v327
          %348 = vst [vmem:[%s343 + $0x10] sm:$0xf] %v328
          %349 = vst [vmem:[%s343 + $0x14] sm:$0xf] %v329
          %350 = vst [vmem:[%s343 + $0x18] sm:$0xf] %v330
          %351 = vst [vmem:[%s343 + $0x1c] sm:$0xf] %v331
          %352 = vst [vmem:[%s343 + $0x20] sm:$0xf] %v332
          %353 = vst [vmem:[%s343 + $0x24] sm:$0xf] %v333
          %354 = vst [vmem:[%s343 + $0x28] sm:$0xf] %v334
          %355 = vst [vmem:[%s343 + $0x2c] sm:$0xf] %v335
          %356 = vst [vmem:[%s343 + $0x30] sm:$0xf] %v336
          %357 = vst [vmem:[%s343 + $0x34] sm:$0xf] %v337
          %358 = vst [vmem:[%s343 + $0x38] sm:$0xf] %v338
          %359 = vst [vmem:[%s343 + $0x3c] sm:$0xf] %v339
          %v360 = vld [vmem:[%s266] sm:$0xf]
          %v361 = vld [vmem:[%s266 + $0x4] sm:$0xf]
          %v362 = vld [vmem:[%s266 + $0x8] sm:$0xf]
          %v363 = vld [vmem:[%s266 + $0xc] sm:$0xf]
          %v364 = vld [vmem:[%s266 + $0x10] sm:$0xf]
          %v365 = vld [vmem:[%s266 + $0x14] sm:$0xf]
          %v366 = vld [vmem:[%s266 + $0x18] sm:$0xf]
          %v367 = vld [vmem:[%s266 + $0x1c] sm:$0xf]
          %v368 = vld [vmem:[%s266 + $0x20] sm:$0xf]
          %v369 = vld [vmem:[%s266 + $0x24] sm:$0xf]
          %v370 = vld [vmem:[%s266 + $0x28] sm:$0xf]
          %v371 = vld [vmem:[%s266 + $0x2c] sm:$0xf]
          %v372 = vld [vmem:[%s266 + $0x30] sm:$0xf]
          %v373 = vld [vmem:[%s266 + $0x34] sm:$0xf]
          %v374 = vld [vmem:[%s266 + $0x38] sm:$0xf]
          %v375 = vld [vmem:[%s266 + $0x3c] sm:$0xf]
          %v376 = vld [vmem:[%s304] sm:$0x1]
          %v378 = vlaneseq
          %v379 = vshrl.u32 %v378, 7
          %v380 = vsub.s32 0, %v379
          %v381 = vrot.slane %v376, %v380
          %v399 = vunpack.c.l.b16 %v324
          %v400 = vunpack.c.l.b16 %v325
          %v401 = vunpack.c.l.b16 %v326
          %v402 = vunpack.c.l.b16 %v327
          %v403 = vunpack.c.l.b16 %v328
          %v404 = vunpack.c.l.b16 %v329
          %v405 = vunpack.c.l.b16 %v330
          %v406 = vunpack.c.l.b16 %v331
          %v407 = vunpack.c.l.b16 %v332
          %v408 = vunpack.c.l.b16 %v333
          %v409 = vunpack.c.l.b16 %v334
          %v410 = vunpack.c.l.b16 %v335
          %v411 = vunpack.c.l.b16 %v336
          %v412 = vunpack.c.l.b16 %v337
          %v413 = vunpack.c.l.b16 %v338
          %v414 = vunpack.c.l.b16 %v339
          %v415 = vpack.c.b16 %v400, %v399
          %v416 = vpack.c.b16 %v402, %v401
          %v417 = vpack.c.b16 %v404, %v403
          %v418 = vpack.c.b16 %v406, %v405
          %v419 = vpack.c.b16 %v408, %v407
          %v420 = vpack.c.b16 %v410, %v409
          %v421 = vpack.c.b16 %v412, %v411
          %v422 = vpack.c.b16 %v414, %v413
          %v447 = vunpack.c.l.b16 %v360
          %v448 = vunpack.c.l.b16 %v361
          %v449 = vunpack.c.l.b16 %v362
          %v450 = vunpack.c.l.b16 %v363
          %v451 = vunpack.c.l.b16 %v364
          %v452 = vunpack.c.l.b16 %v365
          %v453 = vunpack.c.l.b16 %v366
          %v454 = vunpack.c.l.b16 %v367
          %v455 = vunpack.c.l.b16 %v368
          %v456 = vunpack.c.l.b16 %v369
          %v457 = vunpack.c.l.b16 %v370
          %v458 = vunpack.c.l.b16 %v371
          %v459 = vunpack.c.l.b16 %v372
          %v460 = vunpack.c.l.b16 %v373
          %v461 = vunpack.c.l.b16 %v374
          %v462 = vunpack.c.l.b16 %v375
          %v463 = vpack.c.b16 %v448, %v447
          %v464 = vpack.c.b16 %v450, %v449
          %v465 = vpack.c.b16 %v452, %v451
          %v466 = vpack.c.b16 %v454, %v453
          %v467 = vpack.c.b16 %v456, %v455
          %v468 = vpack.c.b16 %v458, %v457
          %v469 = vpack.c.b16 %v460, %v459
          %v470 = vpack.c.b16 %v462, %v461
          %479 = vmatprep.subr.bf16.mxu0 0
          %480 = vmatpush1.bf16.msra.mxu0 %v470
          %481 = vmatprep.subr.bf16.mxu0 0
          %482 = vmatpush1.bf16.msra.mxu0 %v469
          %483 = vmatprep.subr.bf16.mxu0 0
          %484 = vmatpush1.bf16.msra.mxu0 %v468
          %485 = vmatprep.subr.bf16.mxu0 0
          %486 = vmatpush1.bf16.msra.mxu0 %v467
          %487 = vmatprep.subr.bf16.mxu0 0
          %488 = vmatpush1.bf16.msra.mxu0 %v466
          %489 = vmatprep.subr.bf16.mxu0 0
          %490 = vmatpush1.bf16.msra.mxu0 %v465
          %491 = vmatprep.subr.bf16.mxu0 0
          %492 = vmatpush1.bf16.msra.mxu0 %v464
          %493 = vmatprep.subr.bf16.mxu0 0
          %494 = vmatpush1.bf16.msra.mxu0 %v463
          %495 = vmatprep.subr.bf16.mxu0 0
          %496 = vmatpush2.bf16.msra.mxu0 0
          %497 = vmatprep.subr.bf16.mxu0 0
          %498 = vmatpush2.bf16.msra.mxu0 0
          %499 = vmatprep.subr.bf16.mxu0 0
          %500 = vmatpush2.bf16.msra.mxu0 0
          %501 = vmatprep.subr.bf16.mxu0 0
          %502 = vmatpush2.bf16.msra.mxu0 0
          %503 = vmatprep.subr.bf16.mxu0 0
          %504 = vmatpush2.bf16.msra.mxu0 0
          %505 = vmatprep.subr.bf16.mxu0 0
          %506 = vmatpush2.bf16.msra.mxu0 0
          %507 = vmatprep.subr.bf16.mxu0 0
          %508 = vmatpush2.bf16.msra.mxu0 0
          %509 = vmatprep.subr.bf16.mxu0 0
          %510 = vmatpush2.bf16.msra.mxu0 0
          %511 = vmatprep.mubr.bf16.mxu0 0
          %512 = vmatmul.mubr.bf16.gmra.mxu0 %v415
          %v513 = vpop.f32.mrf.mxu0
          %v514 = vadd.f32 %v381, %v513
          %v515 = vpop.f32.mrf.mxu0
          %v516 = vpop.f32.mrf.mxu0
          %v517 = vadd.f32 %v381, %v516
          %v518 = vpop.f32.mrf.mxu0
          %519 = vmatprep.mubr.bf16.mxu0 0
          %520 = vmatmul.mubr.bf16.gmra.mxu0 %v416
          %v521 = vpop.f32.mrf.mxu0
          %v522 = vadd.f32 %v381, %v521
          %v523 = vpop.f32.mrf.mxu0
          %v524 = vpop.f32.mrf.mxu0
          %v525 = vadd.f32 %v381, %v524
          %v526 = vpop.f32.mrf.mxu0
          %527 = vmatprep.mubr.bf16.mxu0 0
          %528 = vmatmul.mubr.bf16.gmra.mxu0 %v417
          %v529 = vpop.f32.mrf.mxu0
          %v530 = vadd.f32 %v381, %v529
          %v531 = vpop.f32.mrf.mxu0
          %v532 = vpop.f32.mrf.mxu0
          %v533 = vadd.f32 %v381, %v532
          %v534 = vpop.f32.mrf.mxu0
          %535 = vmatprep.mubr.bf16.mxu0 0
          %536 = vmatmul.mubr.bf16.gmra.mxu0 %v418
          %v537 = vpop.f32.mrf.mxu0
          %v538 = vadd.f32 %v381, %v537
          %v539 = vpop.f32.mrf.mxu0
          %v540 = vpop.f32.mrf.mxu0
          %v541 = vadd.f32 %v381, %v540
          %v542 = vpop.f32.mrf.mxu0
          %543 = vmatprep.mubr.bf16.mxu0 0
          %544 = vmatmul.mubr.bf16.gmra.mxu0 %v419
          %v545 = vpop.f32.mrf.mxu0
          %v546 = vadd.f32 %v381, %v545
          %v547 = vpop.f32.mrf.mxu0
          %v548 = vpop.f32.mrf.mxu0
          %v549 = vadd.f32 %v381, %v548
          %v550 = vpop.f32.mrf.mxu0
          %551 = vmatprep.mubr.bf16.mxu0 0
          %552 = vmatmul.mubr.bf16.gmra.mxu0 %v420
          %v553 = vpop.f32.mrf.mxu0
          %v554 = vadd.f32 %v381, %v553
          %v555 = vpop.f32.mrf.mxu0
          %v556 = vpop.f32.mrf.mxu0
          %v557 = vadd.f32 %v381, %v556
          %v558 = vpop.f32.mrf.mxu0
          %559 = vmatprep.mubr.bf16.mxu0 0
          %560 = vmatmul.mubr.bf16.gmra.mxu0 %v421
          %v561 = vpop.f32.mrf.mxu0
          %v562 = vadd.f32 %v381, %v561
          %v563 = vpop.f32.mrf.mxu0
          %v564 = vpop.f32.mrf.mxu0
          %v565 = vadd.f32 %v381, %v564
          %v566 = vpop.f32.mrf.mxu0
          %567 = vmatprep.mubr.bf16.mxu0 0
          %568 = vmatmul.mubr.bf16.gmra.mxu0 %v422
          %v569 = vpop.f32.mrf.mxu0
          %v570 = vadd.f32 %v381, %v569
          %v571 = vpop.f32.mrf.mxu0
          %v572 = vpop.f32.mrf.mxu0
          %v573 = vadd.f32 %v381, %v572
          %v574 = vpop.f32.mrf.mxu0
          %575 = vdwg.mxu0
          %v576 = vmul.f32 %v514, %v514
          %v577 = vmul.f32 %v517, %v517
          %v578 = vmul.f32 %v522, %v522
          %v579 = vmul.f32 %v525, %v525
          %v580 = vmul.f32 %v530, %v530
          %v581 = vmul.f32 %v533, %v533
          %v582 = vmul.f32 %v538, %v538
          %v583 = vmul.f32 %v541, %v541
          %v584 = vmul.f32 %v546, %v546
          %v585 = vmul.f32 %v549, %v549
          %v586 = vmul.f32 %v554, %v554
          %v587 = vmul.f32 %v557, %v557
          %v588 = vmul.f32 %v562, %v562
          %v589 = vmul.f32 %v565, %v565
          %v590 = vmul.f32 %v570, %v570
          %v591 = vmul.f32 %v573, %v573
          %592 = vadd.xlane.f32.xlu0 %v576
          %v593 = vpop.xlane.xlu0 %592
          %594 = vadd.xlane.f32.xlu0 %v577
          %v595 = vpop.xlane.xlu0 %594
          %596 = vadd.xlane.f32.xlu0 %v578
          %v597 = vpop.xlane.xlu0 %596
          %598 = vadd.xlane.f32.xlu0 %v579
          %v599 = vpop.xlane.xlu0 %598
          %600 = vadd.xlane.f32.xlu0 %v580
          %v601 = vpop.xlane.xlu0 %600
          %602 = vadd.xlane.f32.xlu0 %v581
          %v603 = vpop.xlane.xlu0 %602
          %604 = vadd.xlane.f32.xlu0 %v582
          %v605 = vpop.xlane.xlu0 %604
          %606 = vadd.xlane.f32.xlu0 %v583
          %v607 = vpop.xlane.xlu0 %606
          %608 = vadd.xlane.f32.xlu0 %v584
          %v609 = vpop.xlane.xlu0 %608
          %610 = vadd.xlane.f32.xlu0 %v585
          %v611 = vpop.xlane.xlu0 %610
          %612 = vadd.xlane.f32.xlu0 %v586
          %v613 = vpop.xlane.xlu0 %612
          %614 = vadd.xlane.f32.xlu0 %v587
          %v615 = vpop.xlane.xlu0 %614
          %616 = vadd.xlane.f32.xlu0 %v588
          %v617 = vpop.xlane.xlu0 %616
          %618 = vadd.xlane.f32.xlu0 %v589
          %v619 = vpop.xlane.xlu0 %618
          %620 = vadd.xlane.f32.xlu0 %v590
          %v621 = vpop.xlane.xlu0 %620
          %622 = vadd.xlane.f32.xlu0 %v591
          %v623 = vpop.xlane.xlu0 %622
          %v624 = vmax.f32 %v593, 1e-24
          %v625 = vmax.f32 %v595, 1e-24
          %v626 = vmax.f32 %v597, 1e-24
          %v627 = vmax.f32 %v599, 1e-24
          %v628 = vmax.f32 %v601, 1e-24
          %v629 = vmax.f32 %v603, 1e-24
          %v630 = vmax.f32 %v605, 1e-24
          %v631 = vmax.f32 %v607, 1e-24
          %v632 = vmax.f32 %v609, 1e-24
          %v633 = vmax.f32 %v611, 1e-24
          %v634 = vmax.f32 %v613, 1e-24
          %v635 = vmax.f32 %v615, 1e-24
          %v636 = vmax.f32 %v617, 1e-24
          %v637 = vmax.f32 %v619, 1e-24
          %v638 = vmax.f32 %v621, 1e-24
          %v639 = vmax.f32 %v623, 1e-24
          %v640 = vrsqrt.pop %v624
          %v641 = vrsqrt.pop %v625
          %v642 = vrsqrt.pop %v626
          %v643 = vrsqrt.pop %v627
          %v644 = vrsqrt.pop %v628
          %v645 = vrsqrt.pop %v629
          %v646 = vrsqrt.pop %v630
          %v647 = vrsqrt.pop %v631
          %v648 = vrsqrt.pop %v632
          %v649 = vrsqrt.pop %v633
          %v650 = vrsqrt.pop %v634
          %v651 = vrsqrt.pop %v635
          %v652 = vrsqrt.pop %v636
          %v653 = vrsqrt.pop %v637
          %v654 = vrsqrt.pop %v638
          %v655 = vrsqrt.pop %v639
          %v656 = vmul.f32 %v514, %v640
          %v657 = vmul.f32 %v517, %v641
          %v658 = vmul.f32 %v522, %v642
          %v659 = vmul.f32 %v525, %v643
          %v660 = vmul.f32 %v530, %v644
          %v661 = vmul.f32 %v533, %v645
          %v662 = vmul.f32 %v538, %v646
          %v663 = vmul.f32 %v541, %v647
          %v664 = vmul.f32 %v546, %v648
          %v665 = vmul.f32 %v549, %v649
          %v666 = vmul.f32 %v554, %v650
          %v667 = vmul.f32 %v557, %v651
          %v668 = vmul.f32 %v562, %v652
          %v669 = vmul.f32 %v565, %v653
          %v670 = vmul.f32 %v570, %v654
          %v671 = vmul.f32 %v573, %v655
          %672 = vst [vmem:[%s298] sm:$0xff] %v656
          %673 = vst [vmem:[%s298 + $0x8] sm:$0xff] %v657
          %674 = vst [vmem:[%s298 + $0x10] sm:$0xff] %v658
          %675 = vst [vmem:[%s298 + $0x18] sm:$0xff] %v659
          %676 = vst [vmem:[%s298 + $0x20] sm:$0xff] %v660
          %677 = vst [vmem:[%s298 + $0x28] sm:$0xff] %v661
          %678 = vst [vmem:[%s298 + $0x30] sm:$0xff] %v662
          %679 = vst [vmem:[%s298 + $0x38] sm:$0xff] %v663
          %680 = vst [vmem:[%s298 + $0x40] sm:$0xff] %v664
          %681 = vst [vmem:[%s298 + $0x48] sm:$0xff] %v665
          %682 = vst [vmem:[%s298 + $0x50] sm:$0xff] %v666
          %683 = vst [vmem:[%s298 + $0x58] sm:$0xff] %v667
          %684 = vst [vmem:[%s298 + $0x60] sm:$0xff] %v668
          %685 = vst [vmem:[%s298 + $0x68] sm:$0xff] %v669
          %686 = vst [vmem:[%s298 + $0x70] sm:$0xff] %v670
          %687 = vst [vmem:[%s298 + $0x78] sm:$0xff] %v671
        $region52: #{tpu_custom_call.1} parent=35 // pred_fallthru
          _
        %p688 = scmp.gt.s32.totalorder %s26, 0
        %p689 = scmp.eq.s32.totalorder %s319, 0
        %p690 = pnand %p688, %p689
        %p691 = pneg %p690
        // Predicated region
        $region53: #{tpu_custom_call.1} parent=35 // pred_check
          _
        $region54: #{tpu_custom_call.1} parent=35 // pred_check_branch
          %693 = sbr.rel (%p690) target = $region56
        $region55: #{tpu_custom_call.1} parent=35 // pred_region
          %s694 = sshra.s32 %s307, 3
          %s695 = sand.u32 %s307, 7
          %s696 = smul.addr %s694, 4
          %s697 = scalar_lea.vmem [#allocation3], %s696
          %v698 = vld [vmem:[%s697] sm:$0xf]
          %v699 = vld [vmem:[%s697 + $0x4] sm:$0xf]
          %v700 = vld [vmem:[%s697 + $0x8] sm:$0xf]
          %v701 = vld [vmem:[%s697 + $0xc] sm:$0xf]
          %v702 = vld [vmem:[%s697 + $0x10] sm:$0xf]
          %v703 = vld [vmem:[%s697 + $0x14] sm:$0xf]
          %v704 = vld [vmem:[%s697 + $0x18] sm:$0xf]
          %v705 = vld [vmem:[%s697 + $0x1c] sm:$0xf]
          %v706 = vld [vmem:[%s697 + $0x20] sm:$0xf]
          %v707 = vld [vmem:[%s697 + $0x24] sm:$0xf]
          %v708 = vld [vmem:[%s697 + $0x28] sm:$0xf]
          %v709 = vld [vmem:[%s697 + $0x2c] sm:$0xf]
          %v710 = vld [vmem:[%s697 + $0x30] sm:$0xf]
          %v711 = vld [vmem:[%s697 + $0x34] sm:$0xf]
          %v712 = vld [vmem:[%s697 + $0x38] sm:$0xf]
          %v713 = vld [vmem:[%s697 + $0x3c] sm:$0xf]
          %s714 = scalar_lea.vmem [#allocation2], 64
          %v715 = vld [vmem:[%s714] sm:$0xf]
          %v716 = vld [vmem:[%s714 + $0x4] sm:$0xf]
          %v717 = vld [vmem:[%s714 + $0x8] sm:$0xf]
          %v718 = vld [vmem:[%s714 + $0xc] sm:$0xf]
          %v719 = vld [vmem:[%s714 + $0x10] sm:$0xf]
          %v720 = vld [vmem:[%s714 + $0x14] sm:$0xf]
          %v721 = vld [vmem:[%s714 + $0x18] sm:$0xf]
          %v722 = vld [vmem:[%s714 + $0x1c] sm:$0xf]
          %v723 = vld [vmem:[%s714 + $0x20] sm:$0xf]
          %v724 = vld [vmem:[%s714 + $0x24] sm:$0xf]
          %v725 = vld [vmem:[%s714 + $0x28] sm:$0xf]
          %v726 = vld [vmem:[%s714 + $0x2c] sm:$0xf]
          %v727 = vld [vmem:[%s714 + $0x30] sm:$0xf]
          %v728 = vld [vmem:[%s714 + $0x34] sm:$0xf]
          %v729 = vld [vmem:[%s714 + $0x38] sm:$0xf]
          %v730 = vld [vmem:[%s714 + $0x3c] sm:$0xf]
          %v747 = vunpack.c.l.b16 %v698
          %v748 = vunpack.c.l.b16 %v699
          %v749 = vunpack.c.l.b16 %v700
          %v750 = vunpack.c.l.b16 %v701
          %v751 = vunpack.c.l.b16 %v702
          %v752 = vunpack.c.l.b16 %v703
          %v753 = vunpack.c.l.b16 %v704
          %v754 = vunpack.c.l.b16 %v705
          %v755 = vunpack.c.l.b16 %v706
          %v756 = vunpack.c.l.b16 %v707
          %v757 = vunpack.c.l.b16 %v708
          %v758 = vunpack.c.l.b16 %v709
          %v759 = vunpack.c.l.b16 %v710
          %v760 = vunpack.c.l.b16 %v711
          %v761 = vunpack.c.l.b16 %v712
          %v762 = vunpack.c.l.b16 %v713
          %v763 = vpack.c.b16 %v748, %v747
          %v764 = vpack.c.b16 %v750, %v749
          %v765 = vpack.c.b16 %v752, %v751
          %v766 = vpack.c.b16 %v754, %v753
          %v767 = vpack.c.b16 %v756, %v755
          %v768 = vpack.c.b16 %v758, %v757
          %v769 = vpack.c.b16 %v760, %v759
          %v770 = vpack.c.b16 %v762, %v761
          %v795 = vunpack.c.l.b16 %v715
          %v796 = vunpack.c.l.b16 %v716
          %v797 = vunpack.c.l.b16 %v717
          %v798 = vunpack.c.l.b16 %v718
          %v799 = vunpack.c.l.b16 %v719
          %v800 = vunpack.c.l.b16 %v720
          %v801 = vunpack.c.l.b16 %v721
          %v802 = vunpack.c.l.b16 %v722
          %v803 = vunpack.c.l.b16 %v723
          %v804 = vunpack.c.l.b16 %v724
          %v805 = vunpack.c.l.b16 %v725
          %v806 = vunpack.c.l.b16 %v726
          %v807 = vunpack.c.l.b16 %v727
          %v808 = vunpack.c.l.b16 %v728
          %v809 = vunpack.c.l.b16 %v729
          %v810 = vunpack.c.l.b16 %v730
          %v811 = vpack.c.b16 %v796, %v795
          %v812 = vpack.c.b16 %v798, %v797
          %v813 = vpack.c.b16 %v800, %v799
          %v814 = vpack.c.b16 %v802, %v801
          %v815 = vpack.c.b16 %v804, %v803
          %v816 = vpack.c.b16 %v806, %v805
          %v817 = vpack.c.b16 %v808, %v807
          %v818 = vpack.c.b16 %v810, %v809
          %827 = vmatprep.subr.bf16.mxu0 0
          %828 = vmatpush1.bf16.msra.mxu0 %v818
          %829 = vmatprep.subr.bf16.mxu0 0
          %830 = vmatpush1.bf16.msra.mxu0 %v817
          %831 = vmatprep.subr.bf16.mxu0 0
          %832 = vmatpush1.bf16.msra.mxu0 %v816
          %833 = vmatprep.subr.bf16.mxu0 0
          %834 = vmatpush1.bf16.msra.mxu0 %v815
          %835 = vmatprep.subr.bf16.mxu0 0
          %836 = vmatpush1.bf16.msra.mxu0 %v814
          %837 = vmatprep.subr.bf16.mxu0 0
          %838 = vmatpush1.bf16.msra.mxu0 %v813
          %839 = vmatprep.subr.bf16.mxu0 0
          %840 = vmatpush1.bf16.msra.mxu0 %v812
          %841 = vmatprep.subr.bf16.mxu0 0
          %842 = vmatpush1.bf16.msra.mxu0 %v811
          %843 = vmatprep.subr.bf16.mxu0 0
          %844 = vmatpush2.bf16.msra.mxu0 0
          %845 = vmatprep.subr.bf16.mxu0 0
          %846 = vmatpush2.bf16.msra.mxu0 0
          %847 = vmatprep.subr.bf16.mxu0 0
          %848 = vmatpush2.bf16.msra.mxu0 0
          %849 = vmatprep.subr.bf16.mxu0 0
          %850 = vmatpush2.bf16.msra.mxu0 0
          %851 = vmatprep.subr.bf16.mxu0 0
          %852 = vmatpush2.bf16.msra.mxu0 0
          %853 = vmatprep.subr.bf16.mxu0 0
          %854 = vmatpush2.bf16.msra.mxu0 0
          %855 = vmatprep.subr.bf16.mxu0 0
          %856 = vmatpush2.bf16.msra.mxu0 0
          %857 = vmatprep.subr.bf16.mxu0 0
          %858 = vmatpush2.bf16.msra.mxu0 0
          %859 = vmatprep.mubr.bf16.mxu0 0
          %860 = vmatmul.mubr.bf16.gmra.mxu0 %v763
          %v861 = vpop.f32.mrf.mxu0
          %v862 = vadd.f32 0.0, %v861
          %v863 = vpop.f32.mrf.mxu0
          %v864 = vpop.f32.mrf.mxu0
          %v865 = vadd.f32 0.0, %v864
          %v866 = vpop.f32.mrf.mxu0
          %867 = vmatprep.mubr.bf16.mxu0 0
          %868 = vmatmul.mubr.bf16.gmra.mxu0 %v764
          %v869 = vpop.f32.mrf.mxu0
          %v870 = vadd.f32 0.0, %v869
          %v871 = vpop.f32.mrf.mxu0
          %v872 = vpop.f32.mrf.mxu0
          %v873 = vadd.f32 0.0, %v872
          %v874 = vpop.f32.mrf.mxu0
          %875 = vmatprep.mubr.bf16.mxu0 0
          %876 = vmatmul.mubr.bf16.gmra.mxu0 %v765
          %v877 = vpop.f32.mrf.mxu0
          %v878 = vadd.f32 0.0, %v877
          %v879 = vpop.f32.mrf.mxu0
          %v880 = vpop.f32.mrf.mxu0
          %v881 = vadd.f32 0.0, %v880
          %v882 = vpop.f32.mrf.mxu0
          %883 = vmatprep.mubr.bf16.mxu0 0
          %884 = vmatmul.mubr.bf16.gmra.mxu0 %v766
          %v885 = vpop.f32.mrf.mxu0
          %v886 = vadd.f32 0.0, %v885
          %v887 = vpop.f32.mrf.mxu0
          %v888 = vpop.f32.mrf.mxu0
          %v889 = vadd.f32 0.0, %v888
          %v890 = vpop.f32.mrf.mxu0
          %891 = vmatprep.mubr.bf16.mxu0 0
          %892 = vmatmul.mubr.bf16.gmra.mxu0 %v767
          %v893 = vpop.f32.mrf.mxu0
          %v894 = vadd.f32 0.0, %v893
          %v895 = vpop.f32.mrf.mxu0
          %v896 = vpop.f32.mrf.mxu0
          %v897 = vadd.f32 0.0, %v896
          %v898 = vpop.f32.mrf.mxu0
          %899 = vmatprep.mubr.bf16.mxu0 0
          %900 = vmatmul.mubr.bf16.gmra.mxu0 %v768
          %v901 = vpop.f32.mrf.mxu0
          %v902 = vadd.f32 0.0, %v901
          %v903 = vpop.f32.mrf.mxu0
          %v904 = vpop.f32.mrf.mxu0
          %v905 = vadd.f32 0.0, %v904
          %v906 = vpop.f32.mrf.mxu0
          %907 = vmatprep.mubr.bf16.mxu0 0
          %908 = vmatmul.mubr.bf16.gmra.mxu0 %v769
          %v909 = vpop.f32.mrf.mxu0
          %v910 = vadd.f32 0.0, %v909
          %v911 = vpop.f32.mrf.mxu0
          %v912 = vpop.f32.mrf.mxu0
          %v913 = vadd.f32 0.0, %v912
          %v914 = vpop.f32.mrf.mxu0
          %915 = vmatprep.mubr.bf16.mxu0 0
          %916 = vmatmul.mubr.bf16.gmra.mxu0 %v770
          %v917 = vpop.f32.mrf.mxu0
          %v918 = vadd.f32 0.0, %v917
          %v919 = vpop.f32.mrf.mxu0
          %v920 = vpop.f32.mrf.mxu0
          %v921 = vadd.f32 0.0, %v920
          %v922 = vpop.f32.mrf.mxu0
          %923 = vdwg.mxu0
          %v924 = vpack.c.bf16 %v865, %v862
          %v925 = vpack.c.bf16 %v873, %v870
          %v926 = vpack.c.bf16 %v881, %v878
          %v927 = vpack.c.bf16 %v889, %v886
          %v928 = vpack.c.bf16 %v897, %v894
          %v929 = vpack.c.bf16 %v905, %v902
          %v930 = vpack.c.bf16 %v913, %v910
          %v931 = vpack.c.bf16 %v921, %v918
          %v940 = vunpack.c.l.b16 %v924
          %v941 = vunpack.c.h.b16 %v924
          %v942 = vunpack.c.l.b16 %v925
          %v943 = vunpack.c.h.b16 %v925
          %v944 = vunpack.c.l.b16 %v926
          %v945 = vunpack.c.h.b16 %v926
          %v946 = vunpack.c.l.b16 %v927
          %v947 = vunpack.c.h.b16 %v927
          %v948 = vunpack.c.l.b16 %v928
          %v949 = vunpack.c.h.b16 %v928
          %v950 = vunpack.c.l.b16 %v929
          %v951 = vunpack.c.h.b16 %v929
          %v952 = vunpack.c.l.b16 %v930
          %v953 = vunpack.c.h.b16 %v930
          %v954 = vunpack.c.l.b16 %v931
          %v955 = vunpack.c.h.b16 %v931
          %v956 = vpack.c.b16 %v940, %v940
          %v957 = vpack.c.b16 %v941, %v941
          %v958 = vpack.c.b16 %v942, %v942
          %v959 = vpack.c.b16 %v943, %v943
          %v960 = vpack.c.b16 %v944, %v944
          %v961 = vpack.c.b16 %v945, %v945
          %v962 = vpack.c.b16 %v946, %v946
          %v963 = vpack.c.b16 %v947, %v947
          %v964 = vpack.c.b16 %v948, %v948
          %v965 = vpack.c.b16 %v949, %v949
          %v966 = vpack.c.b16 %v950, %v950
          %v967 = vpack.c.b16 %v951, %v951
          %v968 = vpack.c.b16 %v952, %v952
          %v969 = vpack.c.b16 %v953, %v953
          %v970 = vpack.c.b16 %v954, %v954
          %v971 = vpack.c.b16 %v955, %v955
          %s988 = smul.addr %s694, 4
          %s989 = scalar_lea.vmem [#allocation2], %s988
          %990 = vst [vmem:[%s989] sm:$0xf] %v956
          %991 = vst [vmem:[%s989 + $0x4] sm:$0xf] %v957
          %992 = vst [vmem:[%s989 + $0x8] sm:$0xf] %v958
          %993 = vst [vmem:[%s989 + $0xc] sm:$0xf] %v959
          %994 = vst [vmem:[%s989 + $0x10] sm:$0xf] %v960
          %995 = vst [vmem:[%s989 + $0x14] sm:$0xf] %v961
          %996 = vst [vmem:[%s989 + $0x18] sm:$0xf] %v962
          %997 = vst [vmem:[%s989 + $0x1c] sm:$0xf] %v963
          %998 = vst [vmem:[%s989 + $0x20] sm:$0xf] %v964
          %999 = vst [vmem:[%s989 + $0x24] sm:$0xf] %v965
          %1000 = vst [vmem:[%s989 + $0x28] sm:$0xf] %v966
          %1001 = vst [vmem:[%s989 + $0x2c] sm:$0xf] %v967
          %1002 = vst [vmem:[%s989 + $0x30] sm:$0xf] %v968
          %1003 = vst [vmem:[%s989 + $0x34] sm:$0xf] %v969
          %1004 = vst [vmem:[%s989 + $0x38] sm:$0xf] %v970
          %1005 = vst [vmem:[%s989 + $0x3c] sm:$0xf] %v971
          %v1006 = vld [vmem:[%s266] sm:$0xf]
          %v1007 = vld [vmem:[%s266 + $0x4] sm:$0xf]
          %v1008 = vld [vmem:[%s266 + $0x8] sm:$0xf]
          %v1009 = vld [vmem:[%s266 + $0xc] sm:$0xf]
          %v1010 = vld [vmem:[%s266 + $0x10] sm:$0xf]
          %v1011 = vld [vmem:[%s266 + $0x14] sm:$0xf]
          %v1012 = vld [vmem:[%s266 + $0x18] sm:$0xf]
          %v1013 = vld [vmem:[%s266 + $0x1c] sm:$0xf]
          %v1014 = vld [vmem:[%s266 + $0x20] sm:$0xf]
          %v1015 = vld [vmem:[%s266 + $0x24] sm:$0xf]
          %v1016 = vld [vmem:[%s266 + $0x28] sm:$0xf]
          %v1017 = vld [vmem:[%s266 + $0x2c] sm:$0xf]
          %v1018 = vld [vmem:[%s266 + $0x30] sm:$0xf]
          %v1019 = vld [vmem:[%s266 + $0x34] sm:$0xf]
          %v1020 = vld [vmem:[%s266 + $0x38] sm:$0xf]
          %v1021 = vld [vmem:[%s266 + $0x3c] sm:$0xf]
          %v1022 = vld [vmem:[%s304] sm:$0x1]
          %v1024 = vlaneseq
          %v1025 = vshrl.u32 %v1024, 7
          %v1026 = vsub.s32 0, %v1025
          %v1027 = vrot.slane %v1022, %v1026
          %v1045 = vunpack.c.l.b16 %v1006
          %v1046 = vunpack.c.l.b16 %v1007
          %v1047 = vunpack.c.l.b16 %v1008
          %v1048 = vunpack.c.l.b16 %v1009
          %v1049 = vunpack.c.l.b16 %v1010
          %v1050 = vunpack.c.l.b16 %v1011
          %v1051 = vunpack.c.l.b16 %v1012
          %v1052 = vunpack.c.l.b16 %v1013
          %v1053 = vunpack.c.l.b16 %v1014
          %v1054 = vunpack.c.l.b16 %v1015
          %v1055 = vunpack.c.l.b16 %v1016
          %v1056 = vunpack.c.l.b16 %v1017
          %v1057 = vunpack.c.l.b16 %v1018
          %v1058 = vunpack.c.l.b16 %v1019
          %v1059 = vunpack.c.l.b16 %v1020
          %v1060 = vunpack.c.l.b16 %v1021
          %v1061 = vpack.c.b16 %v1046, %v1045
          %v1062 = vpack.c.b16 %v1048, %v1047
          %v1063 = vpack.c.b16 %v1050, %v1049
          %v1064 = vpack.c.b16 %v1052, %v1051
          %v1065 = vpack.c.b16 %v1054, %v1053
          %v1066 = vpack.c.b16 %v1056, %v1055
          %v1067 = vpack.c.b16 %v1058, %v1057
          %v1068 = vpack.c.b16 %v1060, %v1059
          %1077 = vmatprep.subr.bf16.mxu0 0
          %1078 = vmatpush1.bf16.msra.mxu0 %v1068
          %1079 = vmatprep.subr.bf16.mxu0 0
          %1080 = vmatpush1.bf16.msra.mxu0 %v1067
          %1081 = vmatprep.subr.bf16.mxu0 0
          %1082 = vmatpush1.bf16.msra.mxu0 %v1066
          %1083 = vmatprep.subr.bf16.mxu0 0
          %1084 = vmatpush1.bf16.msra.mxu0 %v1065
          %1085 = vmatprep.subr.bf16.mxu0 0
          %1086 = vmatpush1.bf16.msra.mxu0 %v1064
          %1087 = vmatprep.subr.bf16.mxu0 0
          %1088 = vmatpush1.bf16.msra.mxu0 %v1063
          %1089 = vmatprep.subr.bf16.mxu0 0
          %1090 = vmatpush1.bf16.msra.mxu0 %v1062
          %1091 = vmatprep.subr.bf16.mxu0 0
          %1092 = vmatpush1.bf16.msra.mxu0 %v1061
          %1093 = vmatprep.subr.bf16.mxu0 0
          %1094 = vmatpush2.bf16.msra.mxu0 0
          %1095 = vmatprep.subr.bf16.mxu0 0
          %1096 = vmatpush2.bf16.msra.mxu0 0
          %1097 = vmatprep.subr.bf16.mxu0 0
          %1098 = vmatpush2.bf16.msra.mxu0 0
          %1099 = vmatprep.subr.bf16.mxu0 0
          %1100 = vmatpush2.bf16.msra.mxu0 0
          %1101 = vmatprep.subr.bf16.mxu0 0
          %1102 = vmatpush2.bf16.msra.mxu0 0
          %1103 = vmatprep.subr.bf16.mxu0 0
          %1104 = vmatpush2.bf16.msra.mxu0 0
          %1105 = vmatprep.subr.bf16.mxu0 0
          %1106 = vmatpush2.bf16.msra.mxu0 0
          %1107 = vmatprep.subr.bf16.mxu0 0
          %1108 = vmatpush2.bf16.msra.mxu0 0
          %1109 = vmatprep.mubr.bf16.mxu0 0
          %1110 = vmatmul.mubr.bf16.gmra.mxu0 %v924
          %v1111 = vpop.f32.mrf.mxu0
          %v1112 = vadd.f32 %v1027, %v1111
          %v1113 = vpop.f32.mrf.mxu0
          %v1114 = vpop.f32.mrf.mxu0
          %v1115 = vadd.f32 %v1027, %v1114
          %v1116 = vpop.f32.mrf.mxu0
          %1117 = vmatprep.mubr.bf16.mxu0 0
          %1118 = vmatmul.mubr.bf16.gmra.mxu0 %v925
          %v1119 = vpop.f32.mrf.mxu0
          %v1120 = vadd.f32 %v1027, %v1119
          %v1121 = vpop.f32.mrf.mxu0
          %v1122 = vpop.f32.mrf.mxu0
          %v1123 = vadd.f32 %v1027, %v1122
          %v1124 = vpop.f32.mrf.mxu0
          %1125 = vmatprep.mubr.bf16.mxu0 0
          %1126 = vmatmul.mubr.bf16.gmra.mxu0 %v926
          %v1127 = vpop.f32.mrf.mxu0
          %v1128 = vadd.f32 %v1027, %v1127
          %v1129 = vpop.f32.mrf.mxu0
          %v1130 = vpop.f32.mrf.mxu0
          %v1131 = vadd.f32 %v1027, %v1130
          %v1132 = vpop.f32.mrf.mxu0
          %1133 = vmatprep.mubr.bf16.mxu0 0
          %1134 = vmatmul.mubr.bf16.gmra.mxu0 %v927
          %v1135 = vpop.f32.mrf.mxu0
          %v1136 = vadd.f32 %v1027, %v1135
          %v1137 = vpop.f32.mrf.mxu0
          %v1138 = vpop.f32.mrf.mxu0
          %v1139 = vadd.f32 %v1027, %v1138
          %v1140 = vpop.f32.mrf.mxu0
          %1141 = vmatprep.mubr.bf16.mxu0 0
          %1142 = vmatmul.mubr.bf16.gmra.mxu0 %v928
          %v1143 = vpop.f32.mrf.mxu0
          %v1144 = vadd.f32 %v1027, %v1143
          %v1145 = vpop.f32.mrf.mxu0
          %v1146 = vpop.f32.mrf.mxu0
          %v1147 = vadd.f32 %v1027, %v1146
          %v1148 = vpop.f32.mrf.mxu0
          %1149 = vmatprep.mubr.bf16.mxu0 0
          %1150 = vmatmul.mubr.bf16.gmra.mxu0 %v929
          %v1151 = vpop.f32.mrf.mxu0
          %v1152 = vadd.f32 %v1027, %v1151
          %v1153 = vpop.f32.mrf.mxu0
          %v1154 = vpop.f32.mrf.mxu0
          %v1155 = vadd.f32 %v1027, %v1154
          %v1156 = vpop.f32.mrf.mxu0
          %1157 = vmatprep.mubr.bf16.mxu0 0
          %1158 = vmatmul.mubr.bf16.gmra.mxu0 %v930
          %v1159 = vpop.f32.mrf.mxu0
          %v1160 = vadd.f32 %v1027, %v1159
          %v1161 = vpop.f32.mrf.mxu0
          %v1162 = vpop.f32.mrf.mxu0
          %v1163 = vadd.f32 %v1027, %v1162
          %v1164 = vpop.f32.mrf.mxu0
          %1165 = vmatprep.mubr.bf16.mxu0 0
          %1166 = vmatmul.mubr.bf16.gmra.mxu0 %v931
          %v1167 = vpop.f32.mrf.mxu0
          %v1168 = vadd.f32 %v1027, %v1167
          %v1169 = vpop.f32.mrf.mxu0
          %v1170 = vpop.f32.mrf.mxu0
          %v1171 = vadd.f32 %v1027, %v1170
          %v1172 = vpop.f32.mrf.mxu0
          %1173 = vdwg.mxu0
          %v1174 = vmul.f32 %v1112, %v1112
          %v1175 = vmul.f32 %v1115, %v1115
          %v1176 = vmul.f32 %v1120, %v1120
          %v1177 = vmul.f32 %v1123, %v1123
          %v1178 = vmul.f32 %v1128, %v1128
          %v1179 = vmul.f32 %v1131, %v1131
          %v1180 = vmul.f32 %v1136, %v1136
          %v1181 = vmul.f32 %v1139, %v1139
          %v1182 = vmul.f32 %v1144, %v1144
          %v1183 = vmul.f32 %v1147, %v1147
          %v1184 = vmul.f32 %v1152, %v1152
          %v1185 = vmul.f32 %v1155, %v1155
          %v1186 = vmul.f32 %v1160, %v1160
          %v1187 = vmul.f32 %v1163, %v1163
          %v1188 = vmul.f32 %v1168, %v1168
          %v1189 = vmul.f32 %v1171, %v1171
          %1190 = vadd.xlane.f32.xlu0 %v1174
          %v1191 = vpop.xlane.xlu0 %1190
          %1192 = vadd.xlane.f32.xlu0 %v1175
          %v1193 = vpop.xlane.xlu0 %1192
          %1194 = vadd.xlane.f32.xlu0 %v1176
          %v1195 = vpop.xlane.xlu0 %1194
          %1196 = vadd.xlane.f32.xlu0 %v1177
          %v1197 = vpop.xlane.xlu0 %1196
          %1198 = vadd.xlane.f32.xlu0 %v1178
          %v1199 = vpop.xlane.xlu0 %1198
          %1200 = vadd.xlane.f32.xlu0 %v1179
          %v1201 = vpop.xlane.xlu0 %1200
          %1202 = vadd.xlane.f32.xlu0 %v1180
          %v1203 = vpop.xlane.xlu0 %1202
          %1204 = vadd.xlane.f32.xlu0 %v1181
          %v1205 = vpop.xlane.xlu0 %1204
          %1206 = vadd.xlane.f32.xlu0 %v1182
          %v1207 = vpop.xlane.xlu0 %1206
          %1208 = vadd.xlane.f32.xlu0 %v1183
          %v1209 = vpop.xlane.xlu0 %1208
          %1210 = vadd.xlane.f32.xlu0 %v1184
          %v1211 = vpop.xlane.xlu0 %1210
          %1212 = vadd.xlane.f32.xlu0 %v1185
          %v1213 = vpop.xlane.xlu0 %1212
          %1214 = vadd.xlane.f32.xlu0 %v1186
          %v1215 = vpop.xlane.xlu0 %1214
          %1216 = vadd.xlane.f32.xlu0 %v1187
          %v1217 = vpop.xlane.xlu0 %1216
          %1218 = vadd.xlane.f32.xlu0 %v1188
          %v1219 = vpop.xlane.xlu0 %1218
          %1220 = vadd.xlane.f32.xlu0 %v1189
          %v1221 = vpop.xlane.xlu0 %1220
          %v1222 = vmax.f32 %v1191, 1e-24
          %v1223 = vmax.f32 %v1193, 1e-24
          %v1224 = vmax.f32 %v1195, 1e-24
          %v1225 = vmax.f32 %v1197, 1e-24
          %v1226 = vmax.f32 %v1199, 1e-24
          %v1227 = vmax.f32 %v1201, 1e-24
          %v1228 = vmax.f32 %v1203, 1e-24
          %v1229 = vmax.f32 %v1205, 1e-24
          %v1230 = vmax.f32 %v1207, 1e-24
          %v1231 = vmax.f32 %v1209, 1e-24
          %v1232 = vmax.f32 %v1211, 1e-24
          %v1233 = vmax.f32 %v1213, 1e-24
          %v1234 = vmax.f32 %v1215, 1e-24
          %v1235 = vmax.f32 %v1217, 1e-24
          %v1236 = vmax.f32 %v1219, 1e-24
          %v1237 = vmax.f32 %v1221, 1e-24
          %v1238 = vrsqrt.pop %v1222
          %v1239 = vrsqrt.pop %v1223
          %v1240 = vrsqrt.pop %v1224
          %v1241 = vrsqrt.pop %v1225
          %v1242 = vrsqrt.pop %v1226
          %v1243 = vrsqrt.pop %v1227
          %v1244 = vrsqrt.pop %v1228
          %v1245 = vrsqrt.pop %v1229
          %v1246 = vrsqrt.pop %v1230
          %v1247 = vrsqrt.pop %v1231
          %v1248 = vrsqrt.pop %v1232
          %v1249 = vrsqrt.pop %v1233
          %v1250 = vrsqrt.pop %v1234
          %v1251 = vrsqrt.pop %v1235
          %v1252 = vrsqrt.pop %v1236
          %v1253 = vrsqrt.pop %v1237
          %v1254 = vmul.f32 %v1112, %v1238
          %v1255 = vmul.f32 %v1115, %v1239
          %v1256 = vmul.f32 %v1120, %v1240
          %v1257 = vmul.f32 %v1123, %v1241
          %v1258 = vmul.f32 %v1128, %v1242
          %v1259 = vmul.f32 %v1131, %v1243
          %v1260 = vmul.f32 %v1136, %v1244
          %v1261 = vmul.f32 %v1139, %v1245
          %v1262 = vmul.f32 %v1144, %v1246
          %v1263 = vmul.f32 %v1147, %v1247
          %v1264 = vmul.f32 %v1152, %v1248
          %v1265 = vmul.f32 %v1155, %v1249
          %v1266 = vmul.f32 %v1160, %v1250
          %v1267 = vmul.f32 %v1163, %v1251
          %v1268 = vmul.f32 %v1168, %v1252
          %v1269 = vmul.f32 %v1171, %v1253
          %1270 = vst [vmem:[%s298] sm:$0xff] %v1254
          %1271 = vst [vmem:[%s298 + $0x8] sm:$0xff] %v1255
          %1272 = vst [vmem:[%s298 + $0x10] sm:$0xff] %v1256
          %1273 = vst [vmem:[%s298 + $0x18] sm:$0xff] %v1257
          %1274 = vst [vmem:[%s298 + $0x20] sm:$0xff] %v1258
          %1275 = vst [vmem:[%s298 + $0x28] sm:$0xff] %v1259
          %1276 = vst [vmem:[%s298 + $0x30] sm:$0xff] %v1260
          %1277 = vst [vmem:[%s298 + $0x38] sm:$0xff] %v1261
          %1278 = vst [vmem:[%s298 + $0x40] sm:$0xff] %v1262
          %1279 = vst [vmem:[%s298 + $0x48] sm:$0xff] %v1263
          %1280 = vst [vmem:[%s298 + $0x50] sm:$0xff] %v1264
          %1281 = vst [vmem:[%s298 + $0x58] sm:$0xff] %v1265
          %1282 = vst [vmem:[%s298 + $0x60] sm:$0xff] %v1266
          %1283 = vst [vmem:[%s298 + $0x68] sm:$0xff] %v1267
          %1284 = vst [vmem:[%s298 + $0x70] sm:$0xff] %v1268
          %1285 = vst [vmem:[%s298 + $0x78] sm:$0xff] %v1269
        $region56: #{tpu_custom_call.1} parent=35 // pred_fallthru
          _
        %p1286 = scmp.eq.s32.totalorder %s319, 1
        %p1287 = pnand %p688, %p1286
        %p1288 = pneg %p1287
        // Predicated region
        $region57: #{tpu_custom_call.1} parent=35 // pred_check
          _
        $region58: #{tpu_custom_call.1} parent=35 // pred_check_branch
          %1290 = sbr.rel (%p1287) target = $region60
        $region59: #{tpu_custom_call.1} parent=35 // pred_region
          %s1291 = sshra.s32 %s307, 3
          %s1292 = sand.u32 %s307, 7
          %s1293 = smul.addr %s1291, 4
          %s1294 = scalar_lea.vmem [#allocation3], %s1293
          %v1295 = vld [vmem:[%s1294] sm:$0xf]
          %v1296 = vld [vmem:[%s1294 + $0x4] sm:$0xf]
          %v1297 = vld [vmem:[%s1294 + $0x8] sm:$0xf]
          %v1298 = vld [vmem:[%s1294 + $0xc] sm:$0xf]
          %v1299 = vld [vmem:[%s1294 + $0x10] sm:$0xf]
          %v1300 = vld [vmem:[%s1294 + $0x14] sm:$0xf]
          %v1301 = vld [vmem:[%s1294 + $0x18] sm:$0xf]
          %v1302 = vld [vmem:[%s1294 + $0x1c] sm:$0xf]
          %v1303 = vld [vmem:[%s1294 + $0x20] sm:$0xf]
          %v1304 = vld [vmem:[%s1294 + $0x24] sm:$0xf]
          %v1305 = vld [vmem:[%s1294 + $0x28] sm:$0xf]
          %v1306 = vld [vmem:[%s1294 + $0x2c] sm:$0xf]
          %v1307 = vld [vmem:[%s1294 + $0x30] sm:$0xf]
          %v1308 = vld [vmem:[%s1294 + $0x34] sm:$0xf]
          %v1309 = vld [vmem:[%s1294 + $0x38] sm:$0xf]
          %v1310 = vld [vmem:[%s1294 + $0x3c] sm:$0xf]
          %v1311 = vld [vmem:[#allocation2] sm:$0xf]
          %v1312 = vld [vmem:[#allocation2 + $0x4] sm:$0xf]
          %v1313 = vld [vmem:[#allocation2 + $0x8] sm:$0xf]
          %v1314 = vld [vmem:[#allocation2 + $0xc] sm:$0xf]
          %v1315 = vld [vmem:[#allocation2 + $0x10] sm:$0xf]
          %v1316 = vld [vmem:[#allocation2 + $0x14] sm:$0xf]
          %v1317 = vld [vmem:[#allocation2 + $0x18] sm:$0xf]
          %v1318 = vld [vmem:[#allocation2 + $0x1c] sm:$0xf]
          %v1319 = vld [vmem:[#allocation2 + $0x20] sm:$0xf]
          %v1320 = vld [vmem:[#allocation2 + $0x24] sm:$0xf]
          %v1321 = vld [vmem:[#allocation2 + $0x28] sm:$0xf]
          %v1322 = vld [vmem:[#allocation2 + $0x2c] sm:$0xf]
          %v1323 = vld [vmem:[#allocation2 + $0x30] sm:$0xf]
          %v1324 = vld [vmem:[#allocation2 + $0x34] sm:$0xf]
          %v1325 = vld [vmem:[#allocation2 + $0x38] sm:$0xf]
          %v1326 = vld [vmem:[#allocation2 + $0x3c] sm:$0xf]
          %v1343 = vunpack.c.l.b16 %v1295
          %v1344 = vunpack.c.l.b16 %v1296
          %v1345 = vunpack.c.l.b16 %v1297
          %v1346 = vunpack.c.l.b16 %v1298
          %v1347 = vunpack.c.l.b16 %v1299
          %v1348 = vunpack.c.l.b16 %v1300
          %v1349 = vunpack.c.l.b16 %v1301
          %v1350 = vunpack.c.l.b16 %v1302
          %v1351 = vunpack.c.l.b16 %v1303
          %v1352 = vunpack.c.l.b16 %v1304
          %v1353 = vunpack.c.l.b16 %v1305
          %v1354 = vunpack.c.l.b16 %v1306
          %v1355 = vunpack.c.l.b16 %v1307
          %v1356 = vunpack.c.l.b16 %v1308
          %v1357 = vunpack.c.l.b16 %v1309
          %v1358 = vunpack.c.l.b16 %v1310
          %v1359 = vpack.c.b16 %v1344, %v1343
          %v1360 = vpack.c.b16 %v1346, %v1345
          %v1361 = vpack.c.b16 %v1348, %v1347
          %v1362 = vpack.c.b16 %v1350, %v1349
          %v1363 = vpack.c.b16 %v1352, %v1351
          %v1364 = vpack.c.b16 %v1354, %v1353
          %v1365 = vpack.c.b16 %v1356, %v1355
          %v1366 = vpack.c.b16 %v1358, %v1357
          %v1391 = vunpack.c.l.b16 %v1311
          %v1392 = vunpack.c.l.b16 %v1312
          %v1393 = vunpack.c.l.b16 %v1313
          %v1394 = vunpack.c.l.b16 %v1314
          %v1395 = vunpack.c.l.b16 %v1315
          %v1396 = vunpack.c.l.b16 %v1316
          %v1397 = vunpack.c.l.b16 %v1317
          %v1398 = vunpack.c.l.b16 %v1318
          %v1399 = vunpack.c.l.b16 %v1319
          %v1400 = vunpack.c.l.b16 %v1320
          %v1401 = vunpack.c.l.b16 %v1321
          %v1402 = vunpack.c.l.b16 %v1322
          %v1403 = vunpack.c.l.b16 %v1323
          %v1404 = vunpack.c.l.b16 %v1324
          %v1405 = vunpack.c.l.b16 %v1325
          %v1406 = vunpack.c.l.b16 %v1326
          %v1407 = vpack.c.b16 %v1392, %v1391
          %v1408 = vpack.c.b16 %v1394, %v1393
          %v1409 = vpack.c.b16 %v1396, %v1395
          %v1410 = vpack.c.b16 %v1398, %v1397
          %v1411 = vpack.c.b16 %v1400, %v1399
          %v1412 = vpack.c.b16 %v1402, %v1401
          %v1413 = vpack.c.b16 %v1404, %v1403
          %v1414 = vpack.c.b16 %v1406, %v1405
          %1423 = vmatprep.subr.bf16.mxu0 0
          %1424 = vmatpush1.bf16.msra.mxu0 %v1414
          %1425 = vmatprep.subr.bf16.mxu0 0
          %1426 = vmatpush1.bf16.msra.mxu0 %v1413
          %1427 = vmatprep.subr.bf16.mxu0 0
          %1428 = vmatpush1.bf16.msra.mxu0 %v1412
          %1429 = vmatprep.subr.bf16.mxu0 0
          %1430 = vmatpush1.bf16.msra.mxu0 %v1411
          %1431 = vmatprep.subr.bf16.mxu0 0
          %1432 = vmatpush1.bf16.msra.mxu0 %v1410
          %1433 = vmatprep.subr.bf16.mxu0 0
          %1434 = vmatpush1.bf16.msra.mxu0 %v1409
          %1435 = vmatprep.subr.bf16.mxu0 0
          %1436 = vmatpush1.bf16.msra.mxu0 %v1408
          %1437 = vmatprep.subr.bf16.mxu0 0
          %1438 = vmatpush1.bf16.msra.mxu0 %v1407
          %1439 = vmatprep.subr.bf16.mxu0 0
          %1440 = vmatpush2.bf16.msra.mxu0 0
          %1441 = vmatprep.subr.bf16.mxu0 0
          %1442 = vmatpush2.bf16.msra.mxu0 0
          %1443 = vmatprep.subr.bf16.mxu0 0
          %1444 = vmatpush2.bf16.msra.mxu0 0
          %1445 = vmatprep.subr.bf16.mxu0 0
          %1446 = vmatpush2.bf16.msra.mxu0 0
          %1447 = vmatprep.subr.bf16.mxu0 0
          %1448 = vmatpush2.bf16.msra.mxu0 0
          %1449 = vmatprep.subr.bf16.mxu0 0
          %1450 = vmatpush2.bf16.msra.mxu0 0
          %1451 = vmatprep.subr.bf16.mxu0 0
          %1452 = vmatpush2.bf16.msra.mxu0 0
          %1453 = vmatprep.subr.bf16.mxu0 0
          %1454 = vmatpush2.bf16.msra.mxu0 0
          %1455 = vmatprep.mubr.bf16.mxu0 0
          %1456 = vmatmul.mubr.bf16.gmra.mxu0 %v1359
          %v1457 = vpop.f32.mrf.mxu0
          %v1458 = vadd.f32 0.0, %v1457
          %v1459 = vpop.f32.mrf.mxu0
          %v1460 = vpop.f32.mrf.mxu0
          %v1461 = vadd.f32 0.0, %v1460
          %v1462 = vpop.f32.mrf.mxu0
          %1463 = vmatprep.mubr.bf16.mxu0 0
          %1464 = vmatmul.mubr.bf16.gmra.mxu0 %v1360
          %v1465 = vpop.f32.mrf.mxu0
          %v1466 = vadd.f32 0.0, %v1465
          %v1467 = vpop.f32.mrf.mxu0
          %v1468 = vpop.f32.mrf.mxu0
          %v1469 = vadd.f32 0.0, %v1468
          %v1470 = vpop.f32.mrf.mxu0
          %1471 = vmatprep.mubr.bf16.mxu0 0
          %1472 = vmatmul.mubr.bf16.gmra.mxu0 %v1361
          %v1473 = vpop.f32.mrf.mxu0
          %v1474 = vadd.f32 0.0, %v1473
          %v1475 = vpop.f32.mrf.mxu0
          %v1476 = vpop.f32.mrf.mxu0
          %v1477 = vadd.f32 0.0, %v1476
          %v1478 = vpop.f32.mrf.mxu0
          %1479 = vmatprep.mubr.bf16.mxu0 0
          %1480 = vmatmul.mubr.bf16.gmra.mxu0 %v1362
          %v1481 = vpop.f32.mrf.mxu0
          %v1482 = vadd.f32 0.0, %v1481
          %v1483 = vpop.f32.mrf.mxu0
          %v1484 = vpop.f32.mrf.mxu0
          %v1485 = vadd.f32 0.0, %v1484
          %v1486 = vpop.f32.mrf.mxu0
          %1487 = vmatprep.mubr.bf16.mxu0 0
          %1488 = vmatmul.mubr.bf16.gmra.mxu0 %v1363
          %v1489 = vpop.f32.mrf.mxu0
          %v1490 = vadd.f32 0.0, %v1489
          %v1491 = vpop.f32.mrf.mxu0
          %v1492 = vpop.f32.mrf.mxu0
          %v1493 = vadd.f32 0.0, %v1492
          %v1494 = vpop.f32.mrf.mxu0
          %1495 = vmatprep.mubr.bf16.mxu0 0
          %1496 = vmatmul.mubr.bf16.gmra.mxu0 %v1364
          %v1497 = vpop.f32.mrf.mxu0
          %v1498 = vadd.f32 0.0, %v1497
          %v1499 = vpop.f32.mrf.mxu0
          %v1500 = vpop.f32.mrf.mxu0
          %v1501 = vadd.f32 0.0, %v1500
          %v1502 = vpop.f32.mrf.mxu0
          %1503 = vmatprep.mubr.bf16.mxu0 0
          %1504 = vmatmul.mubr.bf16.gmra.mxu0 %v1365
          %v1505 = vpop.f32.mrf.mxu0
          %v1506 = vadd.f32 0.0, %v1505
          %v1507 = vpop.f32.mrf.mxu0
          %v1508 = vpop.f32.mrf.mxu0
          %v1509 = vadd.f32 0.0, %v1508
          %v1510 = vpop.f32.mrf.mxu0
          %1511 = vmatprep.mubr.bf16.mxu0 0
          %1512 = vmatmul.mubr.bf16.gmra.mxu0 %v1366
          %v1513 = vpop.f32.mrf.mxu0
          %v1514 = vadd.f32 0.0, %v1513
          %v1515 = vpop.f32.mrf.mxu0
          %v1516 = vpop.f32.mrf.mxu0
          %v1517 = vadd.f32 0.0, %v1516
          %v1518 = vpop.f32.mrf.mxu0
          %1519 = vdwg.mxu0
          %v1520 = vpack.c.bf16 %v1461, %v1458
          %v1521 = vpack.c.bf16 %v1469, %v1466
          %v1522 = vpack.c.bf16 %v1477, %v1474
          %v1523 = vpack.c.bf16 %v1485, %v1482
          %v1524 = vpack.c.bf16 %v1493, %v1490
          %v1525 = vpack.c.bf16 %v1501, %v1498
          %v1526 = vpack.c.bf16 %v1509, %v1506
          %v1527 = vpack.c.bf16 %v1517, %v1514
          %v1536 = vunpack.c.l.b16 %v1520
          %v1537 = vunpack.c.h.b16 %v1520
          %v1538 = vunpack.c.l.b16 %v1521
          %v1539 = vunpack.c.h.b16 %v1521
          %v1540 = vunpack.c.l.b16 %v1522
          %v1541 = vunpack.c.h.b16 %v1522
          %v1542 = vunpack.c.l.b16 %v1523
          %v1543 = vunpack.c.h.b16 %v1523
          %v1544 = vunpack.c.l.b16 %v1524
          %v1545 = vunpack.c.h.b16 %v1524
          %v1546 = vunpack.c.l.b16 %v1525
          %v1547 = vunpack.c.h.b16 %v1525
          %v1548 = vunpack.c.l.b16 %v1526
          %v1549 = vunpack.c.h.b16 %v1526
          %v1550 = vunpack.c.l.b16 %v1527
          %v1551 = vunpack.c.h.b16 %v1527
          %v1552 = vpack.c.b16 %v1536, %v1536
          %v1553 = vpack.c.b16 %v1537, %v1537
          %v1554 = vpack.c.b16 %v1538, %v1538
          %v1555 = vpack.c.b16 %v1539, %v1539
          %v1556 = vpack.c.b16 %v1540, %v1540
          %v1557 = vpack.c.b16 %v1541, %v1541
          %v1558 = vpack.c.b16 %v1542, %v1542
          %v1559 = vpack.c.b16 %v1543, %v1543
          %v1560 = vpack.c.b16 %v1544, %v1544
          %v1561 = vpack.c.b16 %v1545, %v1545
          %v1562 = vpack.c.b16 %v1546, %v1546
          %v1563 = vpack.c.b16 %v1547, %v1547
          %v1564 = vpack.c.b16 %v1548, %v1548
          %v1565 = vpack.c.b16 %v1549, %v1549
          %v1566 = vpack.c.b16 %v1550, %v1550
          %v1567 = vpack.c.b16 %v1551, %v1551
          %s1584 = sadd.s32 %s1291, 16
          %s1585 = smul.addr %s1584, 4
          %s1586 = scalar_lea.vmem [#allocation2], %s1585
          %1587 = vst [vmem:[%s1586] sm:$0xf] %v1552
          %1588 = vst [vmem:[%s1586 + $0x4] sm:$0xf] %v1553
          %1589 = vst [vmem:[%s1586 + $0x8] sm:$0xf] %v1554
          %1590 = vst [vmem:[%s1586 + $0xc] sm:$0xf] %v1555
          %1591 = vst [vmem:[%s1586 + $0x10] sm:$0xf] %v1556
          %1592 = vst [vmem:[%s1586 + $0x14] sm:$0xf] %v1557
          %1593 = vst [vmem:[%s1586 + $0x18] sm:$0xf] %v1558
          %1594 = vst [vmem:[%s1586 + $0x1c] sm:$0xf] %v1559
          %1595 = vst [vmem:[%s1586 + $0x20] sm:$0xf] %v1560
          %1596 = vst [vmem:[%s1586 + $0x24] sm:$0xf] %v1561
          %1597 = vst [vmem:[%s1586 + $0x28] sm:$0xf] %v1562
          %1598 = vst [vmem:[%s1586 + $0x2c] sm:$0xf] %v1563
          %1599 = vst [vmem:[%s1586 + $0x30] sm:$0xf] %v1564
          %1600 = vst [vmem:[%s1586 + $0x34] sm:$0xf] %v1565
          %1601 = vst [vmem:[%s1586 + $0x38] sm:$0xf] %v1566
          %1602 = vst [vmem:[%s1586 + $0x3c] sm:$0xf] %v1567
          %v1603 = vld [vmem:[%s266] sm:$0xf]
          %v1604 = vld [vmem:[%s266 + $0x4] sm:$0xf]
          %v1605 = vld [vmem:[%s266 + $0x8] sm:$0xf]
          %v1606 = vld [vmem:[%s266 + $0xc] sm:$0xf]
          %v1607 = vld [vmem:[%s266 + $0x10] sm:$0xf]
          %v1608 = vld [vmem:[%s266 + $0x14] sm:$0xf]
          %v1609 = vld [vmem:[%s266 + $0x18] sm:$0xf]
          %v1610 = vld [vmem:[%s266 + $0x1c] sm:$0xf]
          %v1611 = vld [vmem:[%s266 + $0x20] sm:$0xf]
          %v1612 = vld [vmem:[%s266 + $0x24] sm:$0xf]
          %v1613 = vld [vmem:[%s266 + $0x28] sm:$0xf]
          %v1614 = vld [vmem:[%s266 + $0x2c] sm:$0xf]
          %v1615 = vld [vmem:[%s266 + $0x30] sm:$0xf]
          %v1616 = vld [vmem:[%s266 + $0x34] sm:$0xf]
          %v1617 = vld [vmem:[%s266 + $0x38] sm:$0xf]
          %v1618 = vld [vmem:[%s266 + $0x3c] sm:$0xf]
          %v1619 = vld [vmem:[%s304] sm:$0x1]
          %v1621 = vlaneseq
          %v1622 = vshrl.u32 %v1621, 7
          %v1623 = vsub.s32 0, %v1622
          %v1624 = vrot.slane %v1619, %v1623
          %v1642 = vunpack.c.l.b16 %v1603
          %v1643 = vunpack.c.l.b16 %v1604
          %v1644 = vunpack.c.l.b16 %v1605
          %v1645 = vunpack.c.l.b16 %v1606
          %v1646 = vunpack.c.l.b16 %v1607
          %v1647 = vunpack.c.l.b16 %v1608
          %v1648 = vunpack.c.l.b16 %v1609
          %v1649 = vunpack.c.l.b16 %v1610
          %v1650 = vunpack.c.l.b16 %v1611
          %v1651 = vunpack.c.l.b16 %v1612
          %v1652 = vunpack.c.l.b16 %v1613
          %v1653 = vunpack.c.l.b16 %v1614
          %v1654 = vunpack.c.l.b16 %v1615
          %v1655 = vunpack.c.l.b16 %v1616
          %v1656 = vunpack.c.l.b16 %v1617
          %v1657 = vunpack.c.l.b16 %v1618
          %v1658 = vpack.c.b16 %v1643, %v1642
          %v1659 = vpack.c.b16 %v1645, %v1644
          %v1660 = vpack.c.b16 %v1647, %v1646
          %v1661 = vpack.c.b16 %v1649, %v1648
          %v1662 = vpack.c.b16 %v1651, %v1650
          %v1663 = vpack.c.b16 %v1653, %v1652
          %v1664 = vpack.c.b16 %v1655, %v1654
          %v1665 = vpack.c.b16 %v1657, %v1656
          %1674 = vmatprep.subr.bf16.mxu0 0
          %1675 = vmatpush1.bf16.msra.mxu0 %v1665
          %1676 = vmatprep.subr.bf16.mxu0 0
          %1677 = vmatpush1.bf16.msra.mxu0 %v1664
          %1678 = vmatprep.subr.bf16.mxu0 0
          %1679 = vmatpush1.bf16.msra.mxu0 %v1663
          %1680 = vmatprep.subr.bf16.mxu0 0
          %1681 = vmatpush1.bf16.msra.mxu0 %v1662
          %1682 = vmatprep.subr.bf16.mxu0 0
          %1683 = vmatpush1.bf16.msra.mxu0 %v1661
          %1684 = vmatprep.subr.bf16.mxu0 0
          %1685 = vmatpush1.bf16.msra.mxu0 %v1660
          %1686 = vmatprep.subr.bf16.mxu0 0
          %1687 = vmatpush1.bf16.msra.mxu0 %v1659
          %1688 = vmatprep.subr.bf16.mxu0 0
          %1689 = vmatpush1.bf16.msra.mxu0 %v1658
          %1690 = vmatprep.subr.bf16.mxu0 0
          %1691 = vmatpush2.bf16.msra.mxu0 0
          %1692 = vmatprep.subr.bf16.mxu0 0
          %1693 = vmatpush2.bf16.msra.mxu0 0
          %1694 = vmatprep.subr.bf16.mxu0 0
          %1695 = vmatpush2.bf16.msra.mxu0 0
          %1696 = vmatprep.subr.bf16.mxu0 0
          %1697 = vmatpush2.bf16.msra.mxu0 0
          %1698 = vmatprep.subr.bf16.mxu0 0
          %1699 = vmatpush2.bf16.msra.mxu0 0
          %1700 = vmatprep.subr.bf16.mxu0 0
          %1701 = vmatpush2.bf16.msra.mxu0 0
          %1702 = vmatprep.subr.bf16.mxu0 0
          %1703 = vmatpush2.bf16.msra.mxu0 0
          %1704 = vmatprep.subr.bf16.mxu0 0
          %1705 = vmatpush2.bf16.msra.mxu0 0
          %1706 = vmatprep.mubr.bf16.mxu0 0
          %1707 = vmatmul.mubr.bf16.gmra.mxu0 %v1520
          %v1708 = vpop.f32.mrf.mxu0
          %v1709 = vadd.f32 %v1624, %v1708
          %v1710 = vpop.f32.mrf.mxu0
          %v1711 = vpop.f32.mrf.mxu0
          %v1712 = vadd.f32 %v1624, %v1711
          %v1713 = vpop.f32.mrf.mxu0
          %1714 = vmatprep.mubr.bf16.mxu0 0
          %1715 = vmatmul.mubr.bf16.gmra.mxu0 %v1521
          %v1716 = vpop.f32.mrf.mxu0
          %v1717 = vadd.f32 %v1624, %v1716
          %v1718 = vpop.f32.mrf.mxu0
          %v1719 = vpop.f32.mrf.mxu0
          %v1720 = vadd.f32 %v1624, %v1719
          %v1721 = vpop.f32.mrf.mxu0
          %1722 = vmatprep.mubr.bf16.mxu0 0
          %1723 = vmatmul.mubr.bf16.gmra.mxu0 %v1522
          %v1724 = vpop.f32.mrf.mxu0
          %v1725 = vadd.f32 %v1624, %v1724
          %v1726 = vpop.f32.mrf.mxu0
          %v1727 = vpop.f32.mrf.mxu0
          %v1728 = vadd.f32 %v1624, %v1727
          %v1729 = vpop.f32.mrf.mxu0
          %1730 = vmatprep.mubr.bf16.mxu0 0
          %1731 = vmatmul.mubr.bf16.gmra.mxu0 %v1523
          %v1732 = vpop.f32.mrf.mxu0
          %v1733 = vadd.f32 %v1624, %v1732
          %v1734 = vpop.f32.mrf.mxu0
          %v1735 = vpop.f32.mrf.mxu0
          %v1736 = vadd.f32 %v1624, %v1735
          %v1737 = vpop.f32.mrf.mxu0
          %1738 = vmatprep.mubr.bf16.mxu0 0
          %1739 = vmatmul.mubr.bf16.gmra.mxu0 %v1524
          %v1740 = vpop.f32.mrf.mxu0
          %v1741 = vadd.f32 %v1624, %v1740
          %v1742 = vpop.f32.mrf.mxu0
          %v1743 = vpop.f32.mrf.mxu0
          %v1744 = vadd.f32 %v1624, %v1743
          %v1745 = vpop.f32.mrf.mxu0
          %1746 = vmatprep.mubr.bf16.mxu0 0
          %1747 = vmatmul.mubr.bf16.gmra.mxu0 %v1525
          %v1748 = vpop.f32.mrf.mxu0
          %v1749 = vadd.f32 %v1624, %v1748
          %v1750 = vpop.f32.mrf.mxu0
          %v1751 = vpop.f32.mrf.mxu0
          %v1752 = vadd.f32 %v1624, %v1751
          %v1753 = vpop.f32.mrf.mxu0
          %1754 = vmatprep.mubr.bf16.mxu0 0
          %1755 = vmatmul.mubr.bf16.gmra.mxu0 %v1526
          %v1756 = vpop.f32.mrf.mxu0
          %v1757 = vadd.f32 %v1624, %v1756
          %v1758 = vpop.f32.mrf.mxu0
          %v1759 = vpop.f32.mrf.mxu0
          %v1760 = vadd.f32 %v1624, %v1759
          %v1761 = vpop.f32.mrf.mxu0
          %1762 = vmatprep.mubr.bf16.mxu0 0
          %1763 = vmatmul.mubr.bf16.gmra.mxu0 %v1527
          %v1764 = vpop.f32.mrf.mxu0
          %v1765 = vadd.f32 %v1624, %v1764
          %v1766 = vpop.f32.mrf.mxu0
          %v1767 = vpop.f32.mrf.mxu0
          %v1768 = vadd.f32 %v1624, %v1767
          %v1769 = vpop.f32.mrf.mxu0
          %1770 = vdwg.mxu0
          %v1771 = vmul.f32 %v1709, %v1709
          %v1772 = vmul.f32 %v1712, %v1712
          %v1773 = vmul.f32 %v1717, %v1717
          %v1774 = vmul.f32 %v1720, %v1720
          %v1775 = vmul.f32 %v1725, %v1725
          %v1776 = vmul.f32 %v1728, %v1728
          %v1777 = vmul.f32 %v1733, %v1733
          %v1778 = vmul.f32 %v1736, %v1736
          %v1779 = vmul.f32 %v1741, %v1741
          %v1780 = vmul.f32 %v1744, %v1744
          %v1781 = vmul.f32 %v1749, %v1749
          %v1782 = vmul.f32 %v1752, %v1752
          %v1783 = vmul.f32 %v1757, %v1757
          %v1784 = vmul.f32 %v1760, %v1760
          %v1785 = vmul.f32 %v1765, %v1765
          %v1786 = vmul.f32 %v1768, %v1768
          %1787 = vadd.xlane.f32.xlu0 %v1771
          %v1788 = vpop.xlane.xlu0 %1787
          %1789 = vadd.xlane.f32.xlu0 %v1772
          %v1790 = vpop.xlane.xlu0 %1789
          %1791 = vadd.xlane.f32.xlu0 %v1773
          %v1792 = vpop.xlane.xlu0 %1791
          %1793 = vadd.xlane.f32.xlu0 %v1774
          %v1794 = vpop.xlane.xlu0 %1793
          %1795 = vadd.xlane.f32.xlu0 %v1775
          %v1796 = vpop.xlane.xlu0 %1795
          %1797 = vadd.xlane.f32.xlu0 %v1776
          %v1798 = vpop.xlane.xlu0 %1797
          %1799 = vadd.xlane.f32.xlu0 %v1777
          %v1800 = vpop.xlane.xlu0 %1799
          %1801 = vadd.xlane.f32.xlu0 %v1778
          %v1802 = vpop.xlane.xlu0 %1801
          %1803 = vadd.xlane.f32.xlu0 %v1779
          %v1804 = vpop.xlane.xlu0 %1803
          %1805 = vadd.xlane.f32.xlu0 %v1780
          %v1806 = vpop.xlane.xlu0 %1805
          %1807 = vadd.xlane.f32.xlu0 %v1781
          %v1808 = vpop.xlane.xlu0 %1807
          %1809 = vadd.xlane.f32.xlu0 %v1782
          %v1810 = vpop.xlane.xlu0 %1809
          %1811 = vadd.xlane.f32.xlu0 %v1783
          %v1812 = vpop.xlane.xlu0 %1811
          %1813 = vadd.xlane.f32.xlu0 %v1784
          %v1814 = vpop.xlane.xlu0 %1813
          %1815 = vadd.xlane.f32.xlu0 %v1785
          %v1816 = vpop.xlane.xlu0 %1815
          %1817 = vadd.xlane.f32.xlu0 %v1786
          %v1818 = vpop.xlane.xlu0 %1817
          %v1819 = vmax.f32 %v1788, 1e-24
          %v1820 = vmax.f32 %v1790, 1e-24
          %v1821 = vmax.f32 %v1792, 1e-24
          %v1822 = vmax.f32 %v1794, 1e-24
          %v1823 = vmax.f32 %v1796, 1e-24
          %v1824 = vmax.f32 %v1798, 1e-24
          %v1825 = vmax.f32 %v1800, 1e-24
          %v1826 = vmax.f32 %v1802, 1e-24
          %v1827 = vmax.f32 %v1804, 1e-24
          %v1828 = vmax.f32 %v1806, 1e-24
          %v1829 = vmax.f32 %v1808, 1e-24
          %v1830 = vmax.f32 %v1810, 1e-24
          %v1831 = vmax.f32 %v1812, 1e-24
          %v1832 = vmax.f32 %v1814, 1e-24
          %v1833 = vmax.f32 %v1816, 1e-24
          %v1834 = vmax.f32 %v1818, 1e-24
          %v1835 = vrsqrt.pop %v1819
          %v1836 = vrsqrt.pop %v1820
          %v1837 = vrsqrt.pop %v1821
          %v1838 = vrsqrt.pop %v1822
          %v1839 = vrsqrt.pop %v1823
          %v1840 = vrsqrt.pop %v1824
          %v1841 = vrsqrt.pop %v1825
          %v1842 = vrsqrt.pop %v1826
          %v1843 = vrsqrt.pop %v1827
          %v1844 = vrsqrt.pop %v1828
          %v1845 = vrsqrt.pop %v1829
          %v1846 = vrsqrt.pop %v1830
          %v1847 = vrsqrt.pop %v1831
          %v1848 = vrsqrt.pop %v1832
          %v1849 = vrsqrt.pop %v1833
          %v1850 = vrsqrt.pop %v1834
          %v1851 = vmul.f32 %v1709, %v1835
          %v1852 = vmul.f32 %v1712, %v1836
          %v1853 = vmul.f32 %v1717, %v1837
          %v1854 = vmul.f32 %v1720, %v1838
          %v1855 = vmul.f32 %v1725, %v1839
          %v1856 = vmul.f32 %v1728, %v1840
          %v1857 = vmul.f32 %v1733, %v1841
          %v1858 = vmul.f32 %v1736, %v1842
          %v1859 = vmul.f32 %v1741, %v1843
          %v1860 = vmul.f32 %v1744, %v1844
          %v1861 = vmul.f32 %v1749, %v1845
          %v1862 = vmul.f32 %v1752, %v1846
          %v1863 = vmul.f32 %v1757, %v1847
          %v1864 = vmul.f32 %v1760, %v1848
          %v1865 = vmul.f32 %v1765, %v1849
          %v1866 = vmul.f32 %v1768, %v1850
          %1867 = vst [vmem:[%s298] sm:$0xff] %v1851
          %1868 = vst [vmem:[%s298 + $0x8] sm:$0xff] %v1852
          %1869 = vst [vmem:[%s298 + $0x10] sm:$0xff] %v1853
          %1870 = vst [vmem:[%s298 + $0x18] sm:$0xff] %v1854
          %1871 = vst [vmem:[%s298 + $0x20] sm:$0xff] %v1855
          %1872 = vst [vmem:[%s298 + $0x28] sm:$0xff] %v1856
          %1873 = vst [vmem:[%s298 + $0x30] sm:$0xff] %v1857
          %1874 = vst [vmem:[%s298 + $0x38] sm:$0xff] %v1858
          %1875 = vst [vmem:[%s298 + $0x40] sm:$0xff] %v1859
          %1876 = vst [vmem:[%s298 + $0x48] sm:$0xff] %v1860
          %1877 = vst [vmem:[%s298 + $0x50] sm:$0xff] %v1861
          %1878 = vst [vmem:[%s298 + $0x58] sm:$0xff] %v1862
          %1879 = vst [vmem:[%s298 + $0x60] sm:$0xff] %v1863
          %1880 = vst [vmem:[%s298 + $0x68] sm:$0xff] %v1864
          %1881 = vst [vmem:[%s298 + $0x70] sm:$0xff] %v1865
          %1882 = vst [vmem:[%s298 + $0x78] sm:$0xff] %v1866
        $region60: #{tpu_custom_call.1} parent=35 // pred_fallthru
          _
        %s1883 = sand.u32 %s147, 1
        %s1884 = scalar_lea.sflag [#allocation5], %s1883
        %s1885 = sand.u32 %s147, 1
        %s1886 = smul.addr %s1885, 128
        %s1887 = scalar_lea.vmem [#allocation9], %s1886
        // Predicated region
        $region61: #{tpu_custom_call.1} parent=35 // pred_check
          %p1888 = pneg %p157
        $region62: #{tpu_custom_call.1} parent=35 // pred_check_branch
          %1890 = sbr.rel (%p1888) target = $region64
        $region63: #{tpu_custom_call.1} parent=35 // pred_region
          %s1891 = smul.u32 16, %s27
          %s1893 = ssub.s32 2048, 2048
          %1894 = vsyncadd %s1884, %s1893
          %s1895 = smul.addr %s1891, 3
          %s1896 = sadd.s32 %s26, %s1895
          %s1897 = smul.addr %s1896, 128
          %s1898 = scalar_lea.hbm %s4, %s1897
          %s1899 = sshll.u32 %s1887, 4
          %s1900 = int_to_ptr.vmem [resolvable:$true] %s1899
          %1905 = dma.vmem_to_hbm [thread:$0]  %s1900, 2048, %s1898, %s1884, 128, 384, 8
        $region64: #{tpu_custom_call.1} parent=35 // pred_fallthru
          _
      $region36: #{tpu_custom_call.1} parent=5 // pred_fallthru
        _
      %p1906 = scmp.le.s32.totalorder 2, %s17
      // Predicated region
      $region65: #{tpu_custom_call.1} parent=5 // pred_check
        %p1907 = pneg %p1906
      $region66: #{tpu_custom_call.1} parent=5 // pred_check_branch
        %1909 = sbr.rel (%p1907) target = $region68
      $region67: #{tpu_custom_call.1} parent=5 // pred_region
        %s1910 = ssub.s32 %s17, 2
        // Predicated region
        $region69: #{tpu_custom_call.1} parent=67 // pred_check
          %p1911 = pneg %p163
        $region70: #{tpu_custom_call.1} parent=67 // pred_check_branch
          %1913 = sbr.rel (%p1911) target = $region72
        $region71: #{tpu_custom_call.1} parent=67 // pred_region
          %s1914 = sand.u32 %s148, 1
          %s1915 = scalar_lea.sflag [#allocation5], %s1914
          %s1916 = sand.u32 %s148, 1
          %s1917 = smul.addr %s1916, 128
          %s1918 = scalar_lea.vmem [#allocation9], %s1917
          %1919 = dma.done %s1915, 2048
        $region72: #{tpu_custom_call.1} parent=67 // pred_fallthru
          _
      $region68: #{tpu_custom_call.1} parent=5 // pred_fallthru
        _
    $region6: #{tpu_custom_call.1} parent=1 // loop_footer
      %s21 = sadd.s32 1, %s17
    $region7: #{tpu_custom_call.1} parent=1 // loop_footer_branch
      %16 = sbr.rel target = $region3
    $region8: #{tpu_custom_call.1} parent=1 // loop_exit
      _
    %1920 = vsyncpa [#allocation4], 1
    %s1921 = scalar_lea.sflag [#allocation4], 1
    %1922 = vsyncpa %s1921, 1
    %1923 = vsyncpa [#allocation7], 1
    %s1924 = scalar_lea.sflag [#allocation7], 1
    %1925 = vsyncpa %s1924, 1
    %1926 = vsyncpa [#allocation5], 1
    %s1927 = scalar_lea.sflag [#allocation5], 1
    %1928 = vsyncpa %s1927, 1

</llo_original>
